<compile_context>
chip_gen: v5e
topology: v5e:2x2
jax: 0.10.0
libtpu: 0.0.40
codegen_flags: <defaults>
</compile_context>

<pallas_src>
import functools

import jax
import jax.numpy as jnp
import numpy as np
from jax.experimental import pallas as pl
from jax.experimental.pallas import tpu as pltpu


def _make_tap_masks(H, W):
    """(9, 1, H*W) f32 masks: 1 where the (dy,dx)-shifted source pixel is in-bounds."""
    hh, ww = np.meshgrid(np.arange(H), np.arange(W), indexing="ij")
    masks = np.zeros((9, 1, H * W), np.float32)
    for kh in range(3):
        for kw in range(3):
            dy, dx = kh - 1, kw - 1
            valid = ((hh + dy >= 0) & (hh + dy < H) &
                     (ww + dx >= 0) & (ww + dx < W))
            masks[kh * 3 + kw, 0, :] = valid.reshape(-1).astype(np.float32)
    return jnp.asarray(masks)


def refine_kernel(masks_ref, x_ref,
                  w_in_ref, b_in_ref,
                  w_p1_ref, b_p1_ref,
                  w_p2_ref, b_p2_ref,
                  w_d1_ref, b_d1_ref,
                  w_d2t_ref, b_d2_ref,
                  w_last_ref, b_last_ref,
                  out_ref,
                  *, W, hw_img, n_img):
    c_pad = x_ref.shape[1]          # channels, zero-padded to a multiple of 8
    L = x_ref.shape[2]              # n_img * hw_img, lane-dense

    def im2col(x):
        # 9 shifted taps: lane roll (XLU) + border mask (VPU).  Each tap is a
        # whole number of (8,128) sublane tiles, so the concatenate is
        # tile-aligned (pure vreg stacking -- no shuffles, no stores).
        taps = []
        for kh in range(3):
            for kw in range(3):
                t = kh * 3 + kw
                s = (kh - 1) * W + (kw - 1)         # flattened spatial offset
                if s == 0:
                    taps.append(x)                  # center tap: no shift, mask == 1
                else:
                    taps.append(pltpu.roll(x, shift=(-s) % L, axis=1)
                                * masks_ref[t])
            # masks also kill any contribution a roll pulls across an image
            # boundary, so multiple images can share the lane axis.
        return jnp.concatenate(taps, axis=0)        # (9*c_pad, L), in registers

    def conv(col, w_ref, b_ref):
        # Single MXU pass per conv: (Cout_pad, 9*C_pad) @ (9*C_pad, L).
        return (jnp.dot(w_ref[...], col, preferred_element_type=jnp.float32)
                + b_ref[...])

    x = x_ref[0]                                    # (c_pad, L)

    # conv_in
    out1 = conv(im2col(x), w_in_ref, b_in_ref)

    # im2col(out1) feeds BOTH CALayer.process conv #1 and conv_last's linear
    # part (3 im2col builds total instead of 4).
    col1 = im2col(out1)
    y = jnp.maximum(conv(col1, w_p1_ref, b_p1_ref), 0.0)
    last_base = conv(col1, w_last_ref, b_last_ref)  # conv_last(out1)

    # CALayer.process conv #2
    y = conv(im2col(y), w_p2_ref, b_p2_ref)

    # Per-image squeeze-excite (VPU/XLU only): global average pool,
    # 1x1 / ReLU, 1x1 / sigmoid, then gate * pooled vector.
    inv_hw = 1.0 / hw_img

    def se(yp):                                     # (c_pad, 1) -> (c_pad, 1)
        h = jnp.maximum(
            jnp.sum(w_d1_ref[...] * yp, axis=0, keepdims=True) + b_d1_ref[...],
            0.0)
        z = jax.nn.sigmoid(
            jnp.sum(w_d2t_ref[...] * h, axis=1, keepdims=True) + b_d2_ref[...])
        return z * yp                               # zero on padded channel rows

    if n_img == 1:
        cvec = se(jnp.sum(y, axis=1, keepdims=True) * inv_hw)        # (c_pad, 1)
    else:
        # Per-image pooling on the folded lane axis via indicator masks
        # (comparisons only -- no reshapes / integer division).
        lane = jax.lax.broadcasted_iota(jnp.int32, (1, L), 1)
        cvec = jnp.zeros((c_pad, L), jnp.float32)
        for i in range(n_img):
            ind = ((lane >= i * hw_img) & (lane < (i + 1) * hw_img)
                   ).astype(jnp.float32)                             # (1, L)
            yp_i = jnp.sum(y * ind, axis=1, keepdims=True) * inv_hw
            cvec = cvec + se(yp_i) * ind                             # (c_pad, L)

    # CALayer output is ca = out1 + cvec with cvec spatially constant per
    # channel (per image), so conv_last(ca) = conv_last(out1) + w_last @ M
    # with M[t*C+ci, p] = cvec[ci, p] * mask[t, p]: a mask-weighted correction
    # matmul instead of a 4th im2col build (no extra rolls).
    m = jnp.concatenate([cvec * masks_ref[t] for t in range(9)], axis=0)
    out = last_base + jnp.dot(w_last_ref[...], m,
                              preferred_element_type=jnp.float32)

    out_ref[0] = out.astype(out_ref.dtype)          # full 8-sublane, unmasked store


def refine_forward(x, params, *, num_chunks=None):
    """x: (B, H, W, C) NHWC float32. Returns (B, H, W, Cout)."""
    B, H, W, C = x.shape
    HW = H * W
    Cout = params["w_last"].shape[-1]
    c_pad = ((C + 7) // 8) * 8
    cout_pad = ((Cout + 7) // 8) * 8

    if num_chunks is None:
        # Default keeps >= 2 grid steps so both v7x TensorCores are fed via the
        # "parallel" axis, while folding any extra batch into the lane axis.
        # On single-TC chips (v5e/v6e), pass num_chunks=1 to fold everything
        # into one step and save the ~0.35 us/step fixed overhead.
        num_chunks = 2 if (B >= 2 and B % 2 == 0) else (1 if B == 1 else B)
    assert B % num_chunks == 0, (B, num_chunks)
    ipp = B // num_chunks                   # images folded per grid step
    L = ipp * HW

    # Lane-dense input slab (chunks, c_pad, ipp*H*W); layout transposes and
    # channel zero-padding live outside the kernel.
    x_t = jnp.transpose(x, (0, 3, 1, 2))                        # (B, C, H, W)
    x_t = jnp.pad(x_t, ((0, 0), (0, c_pad - C), (0, 0), (0, 0)))
    x_slab = (x_t.reshape(num_chunks, ipp, c_pad, HW)
              .transpose(0, 2, 1, 3)
              .reshape(num_chunks, c_pad, L))

    def pack_w3(w, rows_pad):   # (3,3,Cin,Cout) -> (rows_pad, 9*c_pad), tap-major
        cin, cout = w.shape[2], w.shape[3]
        w = jnp.pad(w, ((0, 0), (0, 0), (0, c_pad - cin), (0, rows_pad - cout)))
        return jnp.transpose(w, (3, 0, 1, 2)).reshape(rows_pad, 9 * c_pad)

    def pad_col(v, rows_pad):   # -> (rows_pad, 1) with zero-padded rows
        v = v.reshape(-1, 1)
        return jnp.pad(v, ((0, rows_pad - v.shape[0]), (0, 0)))

    r = params["w_d1"].shape[-1]
    # Per-image border masks, tiled across the images folded into the lanes.
    masks = jnp.tile(_make_tap_masks(H, W), (1, 1, ipp))        # (9, 1, L)

    ordered = [
        pack_w3(params["w_in"], c_pad),   pad_col(params["b_in"], c_pad),
        pack_w3(params["w_p1"], c_pad),   pad_col(params["b_p1"], c_pad),
        pack_w3(params["w_p2"], c_pad),   pad_col(params["b_p2"], c_pad),
        jnp.pad(params["w_d1"], ((0, c_pad - C), (0, 0))),       # (c_pad, r)
        params["b_d1"].reshape(1, r),
        jnp.pad(jnp.transpose(params["w_d2"], (1, 0)),           # (c_pad, r)
                ((0, c_pad - C), (0, 0))),
        pad_col(params["b_d2"], c_pad),
        pack_w3(params["w_last"], cout_pad),
        pad_col(params["b_last"], cout_pad),
    ]

    def rep_spec(a):
        nd = a.ndim
        return pl.BlockSpec(a.shape, lambda b, nd=nd: (0,) * nd)

    in_specs = ([rep_spec(masks),
                 pl.BlockSpec((1, c_pad, L), lambda b: (b, 0, 0))]
                + [rep_spec(a) for a in ordered])

    # TODO(synk): for production image sizes add an H-strip grid axis (1-row
    # halos) and re-derive strip sizing / vmem_limit_bytes for v7x's 64 MiB
    # VMEM instead of whole-image lane folding.
    out_slab = pl.pallas_call(
        functools.partial(refine_kernel, W=W, hw_img=HW, n_img=ipp),
        out_shape=jax.ShapeDtypeStruct((num_chunks, cout_pad, L), x.dtype),
        grid_spec=pltpu.PrefetchScalarGridSpec(
            num_scalar_prefetch=0,
            grid=(num_chunks,),
            in_specs=in_specs,
            out_specs=pl.BlockSpec((1, cout_pad, L), lambda b: (b, 0, 0)),
        ),
        compiler_params=pltpu.CompilerParams(
            dimension_semantics=("parallel",)),
    )(masks, x_slab, *ordered)

    # Unfold lanes -> (B, Cout, H, W) -> NHWC; drop the padded channels.
    out = (out_slab.reshape(num_chunks, cout_pad, ipp, HW)
           .transpose(0, 2, 1, 3)
           .reshape(B, cout_pad, H, W)[:, :Cout])
    return jnp.transpose(out, (0, 2, 3, 1))


def init_params(key, n_feat, out_channel):
    ks = jax.random.split(key, 12)
    s = 0.1
    r = n_feat // 4

    def w(k, shape):
        return jax.random.normal(k, shape, jnp.float32) * s

    return {
        "w_in":   w(ks[0],  (3, 3, n_feat, n_feat)),
        "b_in":   w(ks[1],  (1, 1, n_feat)),
        "w_p1":   w(ks[2],  (3, 3, n_feat, n_feat)),
        "b_p1":   w(ks[3],  (1, 1, n_feat)),
        "w_p2":   w(ks[4],  (3, 3, n_feat, n_feat)),
        "b_p2":   w(ks[5],  (1, 1, n_feat)),
        "w_d1":   w(ks[6],  (n_feat, r)),
        "b_d1":   w(ks[7],  (1, r)),
        "w_d2":   w(ks[8],  (r, n_feat)),
        "b_d2":   w(ks[9],  (1, n_feat)),
        "w_last": w(ks[10], (3, 3, n_feat, out_channel)),
        "b_last": w(ks[11], (1, 1, out_channel)),
    }


def refine_reference(x, p):
    """Pure-JAX reference (NHWC) for validation."""
    def conv3(a, w, b):
        return jax.lax.conv_general_dilated(
            a, w, (1, 1), "SAME",
            dimension_numbers=("NHWC", "HWIO", "NHWC")) + b

    out1 = conv3(x, p["w_in"], p["b_in"])
    y = conv3(out1, p["w_p1"], p["b_p1"])
    y = jnp.maximum(y, 0.0)
    y = conv3(y, p["w_p2"], p["b_p2"])
    yp = jnp.mean(y, axis=(1, 2), keepdims=True)                       # (B,1,1,C)
    h = jnp.maximum(jnp.einsum("bijc,cr->bijr", yp, p["w_d1"]) + p["b_d1"], 0.0)
    z = jax.nn.sigmoid(jnp.einsum("bijr,rc->bijc", h, p["w_d2"]) + p["b_d2"])
    ca = out1 + z * yp
    return conv3(ca, p["w_last"], p["b_last"])


if __name__ == "__main__":
    B, n_feat, H, W = 2, 4, 16, 16
    out_channel = 3

    key = jax.random.PRNGKey(0)
    kx, kp = jax.random.split(key)
    x = jax.random.normal(kx, (B, H, W, n_feat), jnp.float32)
    params = init_params(kp, n_feat, out_channel)

    out = jax.block_until_ready(refine_forward(x, params))
    ref = jax.block_until_ready(refine_reference(x, params))
    np.testing.assert_allclose(np.asarray(out), np.asarray(ref),
                               rtol=1e-4, atol=1e-4)
    print("KERNEL_OK")
</pallas_src>

<mosaic_0001>
module attributes {stable_mosaic.version = 11 : i64} {
  func.func @refine_kernel(%arg0: i32, %arg1: memref<9x1x256xf32, #tpu.memory_space<vmem>>, %arg2: memref<1x8x256xf32, #tpu.memory_space<vmem>>, %arg3: memref<8x72xf32, #tpu.memory_space<vmem>>, %arg4: memref<8x1xf32, #tpu.memory_space<vmem>>, %arg5: memref<8x72xf32, #tpu.memory_space<vmem>>, %arg6: memref<8x1xf32, #tpu.memory_space<vmem>>, %arg7: memref<8x72xf32, #tpu.memory_space<vmem>>, %arg8: memref<8x1xf32, #tpu.memory_space<vmem>>, %arg9: memref<8x1xf32, #tpu.memory_space<vmem>>, %arg10: memref<1x1xf32, #tpu.memory_space<vmem>>, %arg11: memref<8x1xf32, #tpu.memory_space<vmem>>, %arg12: memref<8x1xf32, #tpu.memory_space<vmem>>, %arg13: memref<8x72xf32, #tpu.memory_space<vmem>>, %arg14: memref<8x1xf32, #tpu.memory_space<vmem>>, %arg15: memref<1x8x256xf32, #tpu.memory_space<vmem>>) attributes {dimension_semantics = [#tpu.dimension_semantics<parallel>], iteration_bounds = array<i64: 2>, scalar_prefetch = 0 : i64, scratch_operands = 0 : i64, tpu.core_type = #tpu.core_type<tc>, window_params = [{pipeline_mode = #tpu.pipeline_mode<synchronous>, transform_indices = @transform_0, window_bounds = array<i64: 9, 1, 256>}, {transform_indices = @transform_1, window_bounds = array<i64: 1, 8, 256>}, {pipeline_mode = #tpu.pipeline_mode<synchronous>, transform_indices = @transform_2, window_bounds = array<i64: 8, 72>}, {pipeline_mode = #tpu.pipeline_mode<synchronous>, transform_indices = @transform_3, window_bounds = array<i64: 8, 1>}, {pipeline_mode = #tpu.pipeline_mode<synchronous>, transform_indices = @transform_4, window_bounds = array<i64: 8, 72>}, {pipeline_mode = #tpu.pipeline_mode<synchronous>, transform_indices = @transform_5, window_bounds = array<i64: 8, 1>}, {pipeline_mode = #tpu.pipeline_mode<synchronous>, transform_indices = @transform_6, window_bounds = array<i64: 8, 72>}, {pipeline_mode = #tpu.pipeline_mode<synchronous>, transform_indices = @transform_7, window_bounds = array<i64: 8, 1>}, {pipeline_mode = #tpu.pipeline_mode<synchronous>, transform_indices = @transform_8, window_bounds = array<i64: 8, 1>}, {pipeline_mode = #tpu.pipeline_mode<synchronous>, transform_indices = @transform_9, window_bounds = array<i64: 1, 1>}, {pipeline_mode = #tpu.pipeline_mode<synchronous>, transform_indices = @transform_10, window_bounds = array<i64: 8, 1>}, {pipeline_mode = #tpu.pipeline_mode<synchronous>, transform_indices = @transform_11, window_bounds = array<i64: 8, 1>}, {pipeline_mode = #tpu.pipeline_mode<synchronous>, transform_indices = @transform_12, window_bounds = array<i64: 8, 72>}, {pipeline_mode = #tpu.pipeline_mode<synchronous>, transform_indices = @transform_13, window_bounds = array<i64: 8, 1>}, {transform_indices = @transform_14, window_bounds = array<i64: 1, 8, 256>}]} {
    %c0 = arith.constant 0 : index
    %c0_0 = arith.constant 0 : index
    %c0_1 = arith.constant 0 : index
    %0 = vector.load %arg2[%c0, %c0_0, %c0_1] : memref<1x8x256xf32, #tpu.memory_space<vmem>>, vector<1x8x256xf32>
    %1 = vector.shape_cast %0 : vector<1x8x256xf32> to vector<8x256xf32>
    %c17_i32 = arith.constant 17 : i32
    %2 = tpu.dynamic_rotate %1 by %c17_i32 dim 1 : vector<8x256xf32>, i32 -> vector<8x256xf32>
    %c0_2 = arith.constant 0 : index
    %c0_3 = arith.constant 0 : index
    %c0_4 = arith.constant 0 : index
    %3 = vector.load %arg1[%c0_2, %c0_3, %c0_4] : memref<9x1x256xf32, #tpu.memory_space<vmem>>, vector<1x1x256xf32>
    %4 = vector.shape_cast %3 : vector<1x1x256xf32> to vector<1x256xf32>
    %5 = vector.broadcast %4 : vector<1x256xf32> to vector<8x256xf32>
    %6 = arith.mulf %2, %5 : vector<8x256xf32>
    %c16_i32 = arith.constant 16 : i32
    %7 = tpu.dynamic_rotate %1 by %c16_i32 dim 1 : vector<8x256xf32>, i32 -> vector<8x256xf32>
    %c1 = arith.constant 1 : index
    %c0_5 = arith.constant 0 : index
    %c0_6 = arith.constant 0 : index
    %8 = vector.load %arg1[%c1, %c0_5, %c0_6] : memref<9x1x256xf32, #tpu.memory_space<vmem>>, vector<1x1x256xf32>
    %9 = vector.shape_cast %8 : vector<1x1x256xf32> to vector<1x256xf32>
    %10 = vector.broadcast %9 : vector<1x256xf32> to vector<8x256xf32>
    %11 = arith.mulf %7, %10 : vector<8x256xf32>
    %c15_i32 = arith.constant 15 : i32
    %12 = tpu.dynamic_rotate %1 by %c15_i32 dim 1 : vector<8x256xf32>, i32 -> vector<8x256xf32>
    %c2 = arith.constant 2 : index
    %c0_7 = arith.constant 0 : index
    %c0_8 = arith.constant 0 : index
    %13 = vector.load %arg1[%c2, %c0_7, %c0_8] : memref<9x1x256xf32, #tpu.memory_space<vmem>>, vector<1x1x256xf32>
    %14 = vector.shape_cast %13 : vector<1x1x256xf32> to vector<1x256xf32>
    %15 = vector.broadcast %14 : vector<1x256xf32> to vector<8x256xf32>
    %16 = arith.mulf %12, %15 : vector<8x256xf32>
    %c1_i32 = arith.constant 1 : i32
    %17 = tpu.dynamic_rotate %1 by %c1_i32 dim 1 : vector<8x256xf32>, i32 -> vector<8x256xf32>
    %c3 = arith.constant 3 : index
    %c0_9 = arith.constant 0 : index
    %c0_10 = arith.constant 0 : index
    %18 = vector.load %arg1[%c3, %c0_9, %c0_10] : memref<9x1x256xf32, #tpu.memory_space<vmem>>, vector<1x1x256xf32>
    %19 = vector.shape_cast %18 : vector<1x1x256xf32> to vector<1x256xf32>
    %20 = vector.broadcast %19 : vector<1x256xf32> to vector<8x256xf32>
    %21 = arith.mulf %17, %20 : vector<8x256xf32>
    %c255_i32 = arith.constant 255 : i32
    %22 = tpu.dynamic_rotate %1 by %c255_i32 dim 1 : vector<8x256xf32>, i32 -> vector<8x256xf32>
    %c5 = arith.constant 5 : index
    %c0_11 = arith.constant 0 : index
    %c0_12 = arith.constant 0 : index
    %23 = vector.load %arg1[%c5, %c0_11, %c0_12] : memref<9x1x256xf32, #tpu.memory_space<vmem>>, vector<1x1x256xf32>
    %24 = vector.shape_cast %23 : vector<1x1x256xf32> to vector<1x256xf32>
    %25 = vector.broadcast %24 : vector<1x256xf32> to vector<8x256xf32>
    %26 = arith.mulf %22, %25 : vector<8x256xf32>
    %c241_i32 = arith.constant 241 : i32
    %27 = tpu.dynamic_rotate %1 by %c241_i32 dim 1 : vector<8x256xf32>, i32 -> vector<8x256xf32>
    %c6 = arith.constant 6 : index
    %c0_13 = arith.constant 0 : index
    %c0_14 = arith.constant 0 : index
    %28 = vector.load %arg1[%c6, %c0_13, %c0_14] : memref<9x1x256xf32, #tpu.memory_space<vmem>>, vector<1x1x256xf32>
    %29 = vector.shape_cast %28 : vector<1x1x256xf32> to vector<1x256xf32>
    %30 = vector.broadcast %29 : vector<1x256xf32> to vector<8x256xf32>
    %31 = arith.mulf %27, %30 : vector<8x256xf32>
    %c240_i32 = arith.constant 240 : i32
    %32 = tpu.dynamic_rotate %1 by %c240_i32 dim 1 : vector<8x256xf32>, i32 -> vector<8x256xf32>
    %c7 = arith.constant 7 : index
    %c0_15 = arith.constant 0 : index
    %c0_16 = arith.constant 0 : index
    %33 = vector.load %arg1[%c7, %c0_15, %c0_16] : memref<9x1x256xf32, #tpu.memory_space<vmem>>, vector<1x1x256xf32>
    %34 = vector.shape_cast %33 : vector<1x1x256xf32> to vector<1x256xf32>
    %35 = vector.broadcast %34 : vector<1x256xf32> to vector<8x256xf32>
    %36 = arith.mulf %32, %35 : vector<8x256xf32>
    %c239_i32 = arith.constant 239 : i32
    %37 = tpu.dynamic_rotate %1 by %c239_i32 dim 1 : vector<8x256xf32>, i32 -> vector<8x256xf32>
    %c8 = arith.constant 8 : index
    %c0_17 = arith.constant 0 : index
    %c0_18 = arith.constant 0 : index
    %38 = vector.load %arg1[%c8, %c0_17, %c0_18] : memref<9x1x256xf32, #tpu.memory_space<vmem>>, vector<1x1x256xf32>
    %39 = vector.shape_cast %38 : vector<1x1x256xf32> to vector<1x256xf32>
    %40 = vector.broadcast %39 : vector<1x256xf32> to vector<8x256xf32>
    %41 = arith.mulf %37, %40 : vector<8x256xf32>
    %42 = tpu.concatenate %6, %11, %16, %21, %1, %26, %31, %36, %41 in 0 : vector<8x256xf32>, vector<8x256xf32>, vector<8x256xf32>, vector<8x256xf32>, vector<8x256xf32>, vector<8x256xf32>, vector<8x256xf32>, vector<8x256xf32>, vector<8x256xf32> -> vector<72x256xf32>
    %c0_19 = arith.constant 0 : index
    %c0_20 = arith.constant 0 : index
    %43 = vector.load %arg3[%c0_19, %c0_20] : memref<8x72xf32, #tpu.memory_space<vmem>>, vector<8x72xf32>
    %cst = arith.constant dense<0.000000e+00> : vector<8x256xf32>
    %44 = tpu.matmul %43, %42, %cst {dimension_numbers = #tpu.dot_dimension_numbers<[1], [0], [0], [1], [0, 0, 1, 1], [], []>} : vector<8x72xf32>, vector<72x256xf32>, vector<8x256xf32> -> vector<8x256xf32>
    %c0_21 = arith.constant 0 : index
    %c0_22 = arith.constant 0 : index
    %45 = vector.load %arg4[%c0_21, %c0_22] : memref<8x1xf32, #tpu.memory_space<vmem>>, vector<8x1xf32>
    %46 = vector.broadcast %45 : vector<8x1xf32> to vector<8x256xf32>
    %47 = arith.addf %44, %46 : vector<8x256xf32>
    %c17_i32_23 = arith.constant 17 : i32
    %48 = tpu.dynamic_rotate %47 by %c17_i32_23 dim 1 : vector<8x256xf32>, i32 -> vector<8x256xf32>
    %c0_24 = arith.constant 0 : index
    %c0_25 = arith.constant 0 : index
    %c0_26 = arith.constant 0 : index
    %49 = vector.load %arg1[%c0_24, %c0_25, %c0_26] : memref<9x1x256xf32, #tpu.memory_space<vmem>>, vector<1x1x256xf32>
    %50 = vector.shape_cast %49 : vector<1x1x256xf32> to vector<1x256xf32>
    %51 = vector.broadcast %50 : vector<1x256xf32> to vector<8x256xf32>
    %52 = arith.mulf %48, %51 : vector<8x256xf32>
    %c16_i32_27 = arith.constant 16 : i32
    %53 = tpu.dynamic_rotate %47 by %c16_i32_27 dim 1 : vector<8x256xf32>, i32 -> vector<8x256xf32>
    %c1_28 = arith.constant 1 : index
    %c0_29 = arith.constant 0 : index
    %c0_30 = arith.constant 0 : index
    %54 = vector.load %arg1[%c1_28, %c0_29, %c0_30] : memref<9x1x256xf32, #tpu.memory_space<vmem>>, vector<1x1x256xf32>
    %55 = vector.shape_cast %54 : vector<1x1x256xf32> to vector<1x256xf32>
    %56 = vector.broadcast %55 : vector<1x256xf32> to vector<8x256xf32>
    %57 = arith.mulf %53, %56 : vector<8x256xf32>
    %c15_i32_31 = arith.constant 15 : i32
    %58 = tpu.dynamic_rotate %47 by %c15_i32_31 dim 1 : vector<8x256xf32>, i32 -> vector<8x256xf32>
    %c2_32 = arith.constant 2 : index
    %c0_33 = arith.constant 0 : index
    %c0_34 = arith.constant 0 : index
    %59 = vector.load %arg1[%c2_32, %c0_33, %c0_34] : memref<9x1x256xf32, #tpu.memory_space<vmem>>, vector<1x1x256xf32>
    %60 = vector.shape_cast %59 : vector<1x1x256xf32> to vector<1x256xf32>
    %61 = vector.broadcast %60 : vector<1x256xf32> to vector<8x256xf32>
    %62 = arith.mulf %58, %61 : vector<8x256xf32>
    %c1_i32_35 = arith.constant 1 : i32
    %63 = tpu.dynamic_rotate %47 by %c1_i32_35 dim 1 : vector<8x256xf32>, i32 -> vector<8x256xf32>
    %c3_36 = arith.constant 3 : index
    %c0_37 = arith.constant 0 : index
    %c0_38 = arith.constant 0 : index
    %64 = vector.load %arg1[%c3_36, %c0_37, %c0_38] : memref<9x1x256xf32, #tpu.memory_space<vmem>>, vector<1x1x256xf32>
    %65 = vector.shape_cast %64 : vector<1x1x256xf32> to vector<1x256xf32>
    %66 = vector.broadcast %65 : vector<1x256xf32> to vector<8x256xf32>
    %67 = arith.mulf %63, %66 : vector<8x256xf32>
    %c255_i32_39 = arith.constant 255 : i32
    %68 = tpu.dynamic_rotate %47 by %c255_i32_39 dim 1 : vector<8x256xf32>, i32 -> vector<8x256xf32>
    %c5_40 = arith.constant 5 : index
    %c0_41 = arith.constant 0 : index
    %c0_42 = arith.constant 0 : index
    %69 = vector.load %arg1[%c5_40, %c0_41, %c0_42] : memref<9x1x256xf32, #tpu.memory_space<vmem>>, vector<1x1x256xf32>
    %70 = vector.shape_cast %69 : vector<1x1x256xf32> to vector<1x256xf32>
    %71 = vector.broadcast %70 : vector<1x256xf32> to vector<8x256xf32>
    %72 = arith.mulf %68, %71 : vector<8x256xf32>
    %c241_i32_43 = arith.constant 241 : i32
    %73 = tpu.dynamic_rotate %47 by %c241_i32_43 dim 1 : vector<8x256xf32>, i32 -> vector<8x256xf32>
    %c6_44 = arith.constant 6 : index
    %c0_45 = arith.constant 0 : index
    %c0_46 = arith.constant 0 : index
    %74 = vector.load %arg1[%c6_44, %c0_45, %c0_46] : memref<9x1x256xf32, #tpu.memory_space<vmem>>, vector<1x1x256xf32>
    %75 = vector.shape_cast %74 : vector<1x1x256xf32> to vector<1x256xf32>
    %76 = vector.broadcast %75 : vector<1x256xf32> to vector<8x256xf32>
    %77 = arith.mulf %73, %76 : vector<8x256xf32>
    %c240_i32_47 = arith.constant 240 : i32
    %78 = tpu.dynamic_rotate %47 by %c240_i32_47 dim 1 : vector<8x256xf32>, i32 -> vector<8x256xf32>
    %c7_48 = arith.constant 7 : index
    %c0_49 = arith.constant 0 : index
    %c0_50 = arith.constant 0 : index
    %79 = vector.load %arg1[%c7_48, %c0_49, %c0_50] : memref<9x1x256xf32, #tpu.memory_space<vmem>>, vector<1x1x256xf32>
    %80 = vector.shape_cast %79 : vector<1x1x256xf32> to vector<1x256xf32>
    %81 = vector.broadcast %80 : vector<1x256xf32> to vector<8x256xf32>
    %82 = arith.mulf %78, %81 : vector<8x256xf32>
    %c239_i32_51 = arith.constant 239 : i32
    %83 = tpu.dynamic_rotate %47 by %c239_i32_51 dim 1 : vector<8x256xf32>, i32 -> vector<8x256xf32>
    %c8_52 = arith.constant 8 : index
    %c0_53 = arith.constant 0 : index
    %c0_54 = arith.constant 0 : index
    %84 = vector.load %arg1[%c8_52, %c0_53, %c0_54] : memref<9x1x256xf32, #tpu.memory_space<vmem>>, vector<1x1x256xf32>
    %85 = vector.shape_cast %84 : vector<1x1x256xf32> to vector<1x256xf32>
    %86 = vector.broadcast %85 : vector<1x256xf32> to vector<8x256xf32>
    %87 = arith.mulf %83, %86 : vector<8x256xf32>
    %88 = tpu.concatenate %52, %57, %62, %67, %47, %72, %77, %82, %87 in 0 : vector<8x256xf32>, vector<8x256xf32>, vector<8x256xf32>, vector<8x256xf32>, vector<8x256xf32>, vector<8x256xf32>, vector<8x256xf32>, vector<8x256xf32>, vector<8x256xf32> -> vector<72x256xf32>
    %c0_55 = arith.constant 0 : index
    %c0_56 = arith.constant 0 : index
    %89 = vector.load %arg5[%c0_55, %c0_56] : memref<8x72xf32, #tpu.memory_space<vmem>>, vector<8x72xf32>
    %cst_57 = arith.constant dense<0.000000e+00> : vector<8x256xf32>
    %90 = tpu.matmul %89, %88, %cst_57 {dimension_numbers = #tpu.dot_dimension_numbers<[1], [0], [0], [1], [0, 0, 1, 1], [], []>} : vector<8x72xf32>, vector<72x256xf32>, vector<8x256xf32> -> vector<8x256xf32>
    %c0_58 = arith.constant 0 : index
    %c0_59 = arith.constant 0 : index
    %91 = vector.load %arg6[%c0_58, %c0_59] : memref<8x1xf32, #tpu.memory_space<vmem>>, vector<8x1xf32>
    %92 = vector.broadcast %91 : vector<8x1xf32> to vector<8x256xf32>
    %93 = arith.addf %90, %92 : vector<8x256xf32>
    %cst_60 = arith.constant 0.000000e+00 : f32
    %94 = vector.broadcast %cst_60 : f32 to vector<8x256xf32>
    %95 = arith.maximumf %93, %94 : vector<8x256xf32>
    %c0_61 = arith.constant 0 : index
    %c0_62 = arith.constant 0 : index
    %96 = vector.load %arg13[%c0_61, %c0_62] : memref<8x72xf32, #tpu.memory_space<vmem>>, vector<8x72xf32>
    %cst_63 = arith.constant dense<0.000000e+00> : vector<8x256xf32>
    %97 = tpu.matmul %96, %88, %cst_63 {dimension_numbers = #tpu.dot_dimension_numbers<[1], [0], [0], [1], [0, 0, 1, 1], [], []>} : vector<8x72xf32>, vector<72x256xf32>, vector<8x256xf32> -> vector<8x256xf32>
    %c0_64 = arith.constant 0 : index
    %c0_65 = arith.constant 0 : index
    %98 = vector.load %arg14[%c0_64, %c0_65] : memref<8x1xf32, #tpu.memory_space<vmem>>, vector<8x1xf32>
    %99 = vector.broadcast %98 : vector<8x1xf32> to vector<8x256xf32>
    %100 = arith.addf %97, %99 : vector<8x256xf32>
    %c17_i32_66 = arith.constant 17 : i32
    %101 = tpu.dynamic_rotate %95 by %c17_i32_66 dim 1 : vector<8x256xf32>, i32 -> vector<8x256xf32>
    %c0_67 = arith.constant 0 : index
    %c0_68 = arith.constant 0 : index
    %c0_69 = arith.constant 0 : index
    %102 = vector.load %arg1[%c0_67, %c0_68, %c0_69] : memref<9x1x256xf32, #tpu.memory_space<vmem>>, vector<1x1x256xf32>
    %103 = vector.shape_cast %102 : vector<1x1x256xf32> to vector<1x256xf32>
    %104 = vector.broadcast %103 : vector<1x256xf32> to vector<8x256xf32>
    %105 = arith.mulf %101, %104 : vector<8x256xf32>
    %c16_i32_70 = arith.constant 16 : i32
    %106 = tpu.dynamic_rotate %95 by %c16_i32_70 dim 1 : vector<8x256xf32>, i32 -> vector<8x256xf32>
    %c1_71 = arith.constant 1 : index
    %c0_72 = arith.constant 0 : index
    %c0_73 = arith.constant 0 : index
    %107 = vector.load %arg1[%c1_71, %c0_72, %c0_73] : memref<9x1x256xf32, #tpu.memory_space<vmem>>, vector<1x1x256xf32>
    %108 = vector.shape_cast %107 : vector<1x1x256xf32> to vector<1x256xf32>
    %109 = vector.broadcast %108 : vector<1x256xf32> to vector<8x256xf32>
    %110 = arith.mulf %106, %109 : vector<8x256xf32>
    %c15_i32_74 = arith.constant 15 : i32
    %111 = tpu.dynamic_rotate %95 by %c15_i32_74 dim 1 : vector<8x256xf32>, i32 -> vector<8x256xf32>
    %c2_75 = arith.constant 2 : index
    %c0_76 = arith.constant 0 : index
    %c0_77 = arith.constant 0 : index
    %112 = vector.load %arg1[%c2_75, %c0_76, %c0_77] : memref<9x1x256xf32, #tpu.memory_space<vmem>>, vector<1x1x256xf32>
    %113 = vector.shape_cast %112 : vector<1x1x256xf32> to vector<1x256xf32>
    %114 = vector.broadcast %113 : vector<1x256xf32> to vector<8x256xf32>
    %115 = arith.mulf %111, %114 : vector<8x256xf32>
    %c1_i32_78 = arith.constant 1 : i32
    %116 = tpu.dynamic_rotate %95 by %c1_i32_78 dim 1 : vector<8x256xf32>, i32 -> vector<8x256xf32>
    %c3_79 = arith.constant 3 : index
    %c0_80 = arith.constant 0 : index
    %c0_81 = arith.constant 0 : index
    %117 = vector.load %arg1[%c3_79, %c0_80, %c0_81] : memref<9x1x256xf32, #tpu.memory_space<vmem>>, vector<1x1x256xf32>
    %118 = vector.shape_cast %117 : vector<1x1x256xf32> to vector<1x256xf32>
    %119 = vector.broadcast %118 : vector<1x256xf32> to vector<8x256xf32>
    %120 = arith.mulf %116, %119 : vector<8x256xf32>
    %c255_i32_82 = arith.constant 255 : i32
    %121 = tpu.dynamic_rotate %95 by %c255_i32_82 dim 1 : vector<8x256xf32>, i32 -> vector<8x256xf32>
    %c5_83 = arith.constant 5 : index
    %c0_84 = arith.constant 0 : index
    %c0_85 = arith.constant 0 : index
    %122 = vector.load %arg1[%c5_83, %c0_84, %c0_85] : memref<9x1x256xf32, #tpu.memory_space<vmem>>, vector<1x1x256xf32>
    %123 = vector.shape_cast %122 : vector<1x1x256xf32> to vector<1x256xf32>
    %124 = vector.broadcast %123 : vector<1x256xf32> to vector<8x256xf32>
    %125 = arith.mulf %121, %124 : vector<8x256xf32>
    %c241_i32_86 = arith.constant 241 : i32
    %126 = tpu.dynamic_rotate %95 by %c241_i32_86 dim 1 : vector<8x256xf32>, i32 -> vector<8x256xf32>
    %c6_87 = arith.constant 6 : index
    %c0_88 = arith.constant 0 : index
    %c0_89 = arith.constant 0 : index
    %127 = vector.load %arg1[%c6_87, %c0_88, %c0_89] : memref<9x1x256xf32, #tpu.memory_space<vmem>>, vector<1x1x256xf32>
    %128 = vector.shape_cast %127 : vector<1x1x256xf32> to vector<1x256xf32>
    %129 = vector.broadcast %128 : vector<1x256xf32> to vector<8x256xf32>
    %130 = arith.mulf %126, %129 : vector<8x256xf32>
    %c240_i32_90 = arith.constant 240 : i32
    %131 = tpu.dynamic_rotate %95 by %c240_i32_90 dim 1 : vector<8x256xf32>, i32 -> vector<8x256xf32>
    %c7_91 = arith.constant 7 : index
    %c0_92 = arith.constant 0 : index
    %c0_93 = arith.constant 0 : index
    %132 = vector.load %arg1[%c7_91, %c0_92, %c0_93] : memref<9x1x256xf32, #tpu.memory_space<vmem>>, vector<1x1x256xf32>
    %133 = vector.shape_cast %132 : vector<1x1x256xf32> to vector<1x256xf32>
    %134 = vector.broadcast %133 : vector<1x256xf32> to vector<8x256xf32>
    %135 = arith.mulf %131, %134 : vector<8x256xf32>
    %c239_i32_94 = arith.constant 239 : i32
    %136 = tpu.dynamic_rotate %95 by %c239_i32_94 dim 1 : vector<8x256xf32>, i32 -> vector<8x256xf32>
    %c8_95 = arith.constant 8 : index
    %c0_96 = arith.constant 0 : index
    %c0_97 = arith.constant 0 : index
    %137 = vector.load %arg1[%c8_95, %c0_96, %c0_97] : memref<9x1x256xf32, #tpu.memory_space<vmem>>, vector<1x1x256xf32>
    %138 = vector.shape_cast %137 : vector<1x1x256xf32> to vector<1x256xf32>
    %139 = vector.broadcast %138 : vector<1x256xf32> to vector<8x256xf32>
    %140 = arith.mulf %136, %139 : vector<8x256xf32>
    %141 = tpu.concatenate %105, %110, %115, %120, %95, %125, %130, %135, %140 in 0 : vector<8x256xf32>, vector<8x256xf32>, vector<8x256xf32>, vector<8x256xf32>, vector<8x256xf32>, vector<8x256xf32>, vector<8x256xf32>, vector<8x256xf32>, vector<8x256xf32> -> vector<72x256xf32>
    %c0_98 = arith.constant 0 : index
    %c0_99 = arith.constant 0 : index
    %142 = vector.load %arg7[%c0_98, %c0_99] : memref<8x72xf32, #tpu.memory_space<vmem>>, vector<8x72xf32>
    %cst_100 = arith.constant dense<0.000000e+00> : vector<8x256xf32>
    %143 = tpu.matmul %142, %141, %cst_100 {dimension_numbers = #tpu.dot_dimension_numbers<[1], [0], [0], [1], [0, 0, 1, 1], [], []>} : vector<8x72xf32>, vector<72x256xf32>, vector<8x256xf32> -> vector<8x256xf32>
    %c0_101 = arith.constant 0 : index
    %c0_102 = arith.constant 0 : index
    %144 = vector.load %arg8[%c0_101, %c0_102] : memref<8x1xf32, #tpu.memory_space<vmem>>, vector<8x1xf32>
    %145 = vector.broadcast %144 : vector<8x1xf32> to vector<8x256xf32>
    %146 = arith.addf %143, %145 : vector<8x256xf32>
    %cst_103 = arith.constant dense<0.000000e+00> : vector<8xf32>
    %147 = vector.multi_reduction <add>, %146, %cst_103 [1] : vector<8x256xf32> to vector<8xf32>
    %148 = vector.shape_cast %147 : vector<8xf32> to vector<8x1xf32>
    %cst_104 = arith.constant 3.906250e-03 : f32
    %149 = vector.broadcast %cst_104 : f32 to vector<8x1xf32>
    %150 = arith.mulf %148, %149 : vector<8x1xf32>
    %c0_105 = arith.constant 0 : index
    %c0_106 = arith.constant 0 : index
    %151 = vector.load %arg9[%c0_105, %c0_106] : memref<8x1xf32, #tpu.memory_space<vmem>>, vector<8x1xf32>
    %152 = arith.mulf %151, %150 : vector<8x1xf32>
    %cst_107 = arith.constant dense<0.000000e+00> : vector<1xf32>
    %153 = vector.multi_reduction <add>, %152, %cst_107 [0] : vector<8x1xf32> to vector<1xf32>
    %154 = vector.shape_cast %153 : vector<1xf32> to vector<1x1xf32>
    %c0_108 = arith.constant 0 : index
    %c0_109 = arith.constant 0 : index
    %155 = vector.load %arg10[%c0_108, %c0_109] : memref<1x1xf32, #tpu.memory_space<vmem>>, vector<1x1xf32>
    %156 = arith.addf %154, %155 : vector<1x1xf32>
    %cst_110 = arith.constant 0.000000e+00 : f32
    %157 = vector.broadcast %cst_110 : f32 to vector<1x1xf32>
    %158 = arith.maximumf %156, %157 : vector<1x1xf32>
    %c0_111 = arith.constant 0 : index
    %c0_112 = arith.constant 0 : index
    %159 = vector.load %arg11[%c0_111, %c0_112] : memref<8x1xf32, #tpu.memory_space<vmem>>, vector<8x1xf32>
    %160 = vector.broadcast %158 : vector<1x1xf32> to vector<8x1xf32>
    %161 = arith.mulf %159, %160 : vector<8x1xf32>
    %cst_113 = arith.constant dense<0.000000e+00> : vector<8xf32>
    %162 = vector.multi_reduction <add>, %161, %cst_113 [1] : vector<8x1xf32> to vector<8xf32>
    %163 = vector.shape_cast %162 : vector<8xf32> to vector<8x1xf32>
    %c0_114 = arith.constant 0 : index
    %c0_115 = arith.constant 0 : index
    %164 = vector.load %arg12[%c0_114, %c0_115] : memref<8x1xf32, #tpu.memory_space<vmem>>, vector<8x1xf32>
    %165 = arith.addf %163, %164 : vector<8x1xf32>
    %166 = arith.negf %165 : vector<8x1xf32>
    %167 = math.exp %166 : vector<8x1xf32>
    %cst_116 = arith.constant 1.000000e+00 : f32
    %168 = vector.broadcast %cst_116 : f32 to vector<8x1xf32>
    %169 = arith.addf %168, %167 : vector<8x1xf32>
    %170 = arith.divf %168, %169 : vector<8x1xf32>
    %171 = arith.mulf %170, %150 : vector<8x1xf32>
    %c0_117 = arith.constant 0 : index
    %c0_118 = arith.constant 0 : index
    %c0_119 = arith.constant 0 : index
    %172 = vector.load %arg1[%c0_117, %c0_118, %c0_119] : memref<9x1x256xf32, #tpu.memory_space<vmem>>, vector<1x1x256xf32>
    %173 = vector.shape_cast %172 : vector<1x1x256xf32> to vector<1x256xf32>
    %174 = vector.broadcast %171 : vector<8x1xf32> to vector<8x256xf32>
    %175 = vector.broadcast %173 : vector<1x256xf32> to vector<8x256xf32>
    %176 = arith.mulf %174, %175 : vector<8x256xf32>
    %c1_120 = arith.constant 1 : index
    %c0_121 = arith.constant 0 : index
    %c0_122 = arith.constant 0 : index
    %177 = vector.load %arg1[%c1_120, %c0_121, %c0_122] : memref<9x1x256xf32, #tpu.memory_space<vmem>>, vector<1x1x256xf32>
    %178 = vector.shape_cast %177 : vector<1x1x256xf32> to vector<1x256xf32>
    %179 = vector.broadcast %171 : vector<8x1xf32> to vector<8x256xf32>
    %180 = vector.broadcast %178 : vector<1x256xf32> to vector<8x256xf32>
    %181 = arith.mulf %179, %180 : vector<8x256xf32>
    %c2_123 = arith.constant 2 : index
    %c0_124 = arith.constant 0 : index
    %c0_125 = arith.constant 0 : index
    %182 = vector.load %arg1[%c2_123, %c0_124, %c0_125] : memref<9x1x256xf32, #tpu.memory_space<vmem>>, vector<1x1x256xf32>
    %183 = vector.shape_cast %182 : vector<1x1x256xf32> to vector<1x256xf32>
    %184 = vector.broadcast %171 : vector<8x1xf32> to vector<8x256xf32>
    %185 = vector.broadcast %183 : vector<1x256xf32> to vector<8x256xf32>
    %186 = arith.mulf %184, %185 : vector<8x256xf32>
    %c3_126 = arith.constant 3 : index
    %c0_127 = arith.constant 0 : index
    %c0_128 = arith.constant 0 : index
    %187 = vector.load %arg1[%c3_126, %c0_127, %c0_128] : memref<9x1x256xf32, #tpu.memory_space<vmem>>, vector<1x1x256xf32>
    %188 = vector.shape_cast %187 : vector<1x1x256xf32> to vector<1x256xf32>
    %189 = vector.broadcast %171 : vector<8x1xf32> to vector<8x256xf32>
    %190 = vector.broadcast %188 : vector<1x256xf32> to vector<8x256xf32>
    %191 = arith.mulf %189, %190 : vector<8x256xf32>
    %c4 = arith.constant 4 : index
    %c0_129 = arith.constant 0 : index
    %c0_130 = arith.constant 0 : index
    %192 = vector.load %arg1[%c4, %c0_129, %c0_130] : memref<9x1x256xf32, #tpu.memory_space<vmem>>, vector<1x1x256xf32>
    %193 = vector.shape_cast %192 : vector<1x1x256xf32> to vector<1x256xf32>
    %194 = vector.broadcast %171 : vector<8x1xf32> to vector<8x256xf32>
    %195 = vector.broadcast %193 : vector<1x256xf32> to vector<8x256xf32>
    %196 = arith.mulf %194, %195 : vector<8x256xf32>
    %c5_131 = arith.constant 5 : index
    %c0_132 = arith.constant 0 : index
    %c0_133 = arith.constant 0 : index
    %197 = vector.load %arg1[%c5_131, %c0_132, %c0_133] : memref<9x1x256xf32, #tpu.memory_space<vmem>>, vector<1x1x256xf32>
    %198 = vector.shape_cast %197 : vector<1x1x256xf32> to vector<1x256xf32>
    %199 = vector.broadcast %171 : vector<8x1xf32> to vector<8x256xf32>
    %200 = vector.broadcast %198 : vector<1x256xf32> to vector<8x256xf32>
    %201 = arith.mulf %199, %200 : vector<8x256xf32>
    %c6_134 = arith.constant 6 : index
    %c0_135 = arith.constant 0 : index
    %c0_136 = arith.constant 0 : index
    %202 = vector.load %arg1[%c6_134, %c0_135, %c0_136] : memref<9x1x256xf32, #tpu.memory_space<vmem>>, vector<1x1x256xf32>
    %203 = vector.shape_cast %202 : vector<1x1x256xf32> to vector<1x256xf32>
    %204 = vector.broadcast %171 : vector<8x1xf32> to vector<8x256xf32>
    %205 = vector.broadcast %203 : vector<1x256xf32> to vector<8x256xf32>
    %206 = arith.mulf %204, %205 : vector<8x256xf32>
    %c7_137 = arith.constant 7 : index
    %c0_138 = arith.constant 0 : index
    %c0_139 = arith.constant 0 : index
    %207 = vector.load %arg1[%c7_137, %c0_138, %c0_139] : memref<9x1x256xf32, #tpu.memory_space<vmem>>, vector<1x1x256xf32>
    %208 = vector.shape_cast %207 : vector<1x1x256xf32> to vector<1x256xf32>
    %209 = vector.broadcast %171 : vector<8x1xf32> to vector<8x256xf32>
    %210 = vector.broadcast %208 : vector<1x256xf32> to vector<8x256xf32>
    %211 = arith.mulf %209, %210 : vector<8x256xf32>
    %c8_140 = arith.constant 8 : index
    %c0_141 = arith.constant 0 : index
    %c0_142 = arith.constant 0 : index
    %212 = vector.load %arg1[%c8_140, %c0_141, %c0_142] : memref<9x1x256xf32, #tpu.memory_space<vmem>>, vector<1x1x256xf32>
    %213 = vector.shape_cast %212 : vector<1x1x256xf32> to vector<1x256xf32>
    %214 = vector.broadcast %171 : vector<8x1xf32> to vector<8x256xf32>
    %215 = vector.broadcast %213 : vector<1x256xf32> to vector<8x256xf32>
    %216 = arith.mulf %214, %215 : vector<8x256xf32>
    %217 = tpu.concatenate %176, %181, %186, %191, %196, %201, %206, %211, %216 in 0 : vector<8x256xf32>, vector<8x256xf32>, vector<8x256xf32>, vector<8x256xf32>, vector<8x256xf32>, vector<8x256xf32>, vector<8x256xf32>, vector<8x256xf32>, vector<8x256xf32> -> vector<72x256xf32>
    %c0_143 = arith.constant 0 : index
    %c0_144 = arith.constant 0 : index
    %218 = vector.load %arg13[%c0_143, %c0_144] : memref<8x72xf32, #tpu.memory_space<vmem>>, vector<8x72xf32>
    %cst_145 = arith.constant dense<0.000000e+00> : vector<8x256xf32>
    %219 = tpu.matmul %218, %217, %cst_145 {dimension_numbers = #tpu.dot_dimension_numbers<[1], [0], [0], [1], [0, 0, 1, 1], [], []>} : vector<8x72xf32>, vector<72x256xf32>, vector<8x256xf32> -> vector<8x256xf32>
    %220 = arith.addf %100, %219 : vector<8x256xf32>
    %c0_146 = arith.constant 0 : index
    %c0_147 = arith.constant 0 : index
    %c0_148 = arith.constant 0 : index
    %221 = vector.load %arg15[%c0_146, %c0_147, %c0_148] : memref<1x8x256xf32, #tpu.memory_space<vmem>>, vector<1x8x256xf32>
    %222 = vector.shape_cast %221 : vector<1x8x256xf32> to vector<8x256xf32>
    %223 = vector.shape_cast %220 : vector<8x256xf32> to vector<1x8x256xf32>
    tpu.vector_store %arg15[%c0_146, %c0_147, %c0_148], %223 {strides = array<i32>} : memref<1x8x256xf32, #tpu.memory_space<vmem>>, vector<1x8x256xf32>,
    return
  }
  func.func @transform_0(%arg0: i32) -> (i32, i32, i32) {
    %c0_i32 = arith.constant 0 : i32
    %c0_i32_0 = arith.constant 0 : i32
    %c0_i32_1 = arith.constant 0 : i32
    %c0_i32_2 = arith.constant 0 : i32
    return %c0_i32, %c0_i32_0, %c0_i32_1 : i32, i32, i32
  }
  func.func @transform_1(%arg0: i32) -> (i32, i32, i32) {
    %c0_i32 = arith.constant 0 : i32
    %c0_i32_0 = arith.constant 0 : i32
    %c0_i32_1 = arith.constant 0 : i32
    return %arg0, %c0_i32, %c0_i32_0 : i32, i32, i32
  }
  func.func @transform_2(%arg0: i32) -> (i32, i32) {
    %c0_i32 = arith.constant 0 : i32
    %c0_i32_0 = arith.constant 0 : i32
    %c0_i32_1 = arith.constant 0 : i32
    return %c0_i32, %c0_i32_0 : i32, i32
  }
  func.func @transform_3(%arg0: i32) -> (i32, i32) {
    %c0_i32 = arith.constant 0 : i32
    %c0_i32_0 = arith.constant 0 : i32
    %c0_i32_1 = arith.constant 0 : i32
    return %c0_i32, %c0_i32_0 : i32, i32
  }
  func.func @transform_4(%arg0: i32) -> (i32, i32) {
    %c0_i32 = arith.constant 0 : i32
    %c0_i32_0 = arith.constant 0 : i32
    %c0_i32_1 = arith.constant 0 : i32
    return %c0_i32, %c0_i32_0 : i32, i32
  }
  func.func @transform_5(%arg0: i32) -> (i32, i32) {
    %c0_i32 = arith.constant 0 : i32
    %c0_i32_0 = arith.constant 0 : i32
    %c0_i32_1 = arith.constant 0 : i32
    return %c0_i32, %c0_i32_0 : i32, i32
  }
  func.func @transform_6(%arg0: i32) -> (i32, i32) {
    %c0_i32 = arith.constant 0 : i32
    %c0_i32_0 = arith.constant 0 : i32
    %c0_i32_1 = arith.constant 0 : i32
    return %c0_i32, %c0_i32_0 : i32, i32
  }
  func.func @transform_7(%arg0: i32) -> (i32, i32) {
    %c0_i32 = arith.constant 0 : i32
    %c0_i32_0 = arith.constant 0 : i32
    %c0_i32_1 = arith.constant 0 : i32
    return %c0_i32, %c0_i32_0 : i32, i32
  }
  func.func @transform_8(%arg0: i32) -> (i32, i32) {
    %c0_i32 = arith.constant 0 : i32
    %c0_i32_0 = arith.constant 0 : i32
    %c0_i32_1 = arith.constant 0 : i32
    return %c0_i32, %c0_i32_0 : i32, i32
  }
  func.func @transform_9(%arg0: i32) -> (i32, i32) {
    %c0_i32 = arith.constant 0 : i32
    %c0_i32_0 = arith.constant 0 : i32
    %c0_i32_1 = arith.constant 0 : i32
    return %c0_i32, %c0_i32_0 : i32, i32
  }
  func.func @transform_10(%arg0: i32) -> (i32, i32) {
    %c0_i32 = arith.constant 0 : i32
    %c0_i32_0 = arith.constant 0 : i32
    %c0_i32_1 = arith.constant 0 : i32
    return %c0_i32, %c0_i32_0 : i32, i32
  }
  func.func @transform_11(%arg0: i32) -> (i32, i32) {
    %c0_i32 = arith.constant 0 : i32
    %c0_i32_0 = arith.constant 0 : i32
    %c0_i32_1 = arith.constant 0 : i32
    return %c0_i32, %c0_i32_0 : i32, i32
  }
  func.func @transform_12(%arg0: i32) -> (i32, i32) {
    %c0_i32 = arith.constant 0 : i32
    %c0_i32_0 = arith.constant 0 : i32
    %c0_i32_1 = arith.constant 0 : i32
    return %c0_i32, %c0_i32_0 : i32, i32
  }
  func.func @transform_13(%arg0: i32) -> (i32, i32) {
    %c0_i32 = arith.constant 0 : i32
    %c0_i32_0 = arith.constant 0 : i32
    %c0_i32_1 = arith.constant 0 : i32
    return %c0_i32, %c0_i32_0 : i32, i32
  }
  func.func @transform_14(%arg0: i32) -> (i32, i32, i32) {
    %c0_i32 = arith.constant 0 : i32
    %c0_i32_0 = arith.constant 0 : i32
    %c0_i32_1 = arith.constant 0 : i32
    return %arg0, %c0_i32, %c0_i32_0 : i32, i32, i32
  }
}

</mosaic_0001>

<llo_original>
// kernel: tpu_custom_call.1
$region0: #{tpu_custom_call.1}
  #allocation0 [shape = 'u32[]', space=smem, size = 0x4, offset = 0x4, fixed_abs, tag = 'smem constant byte address 0x4 - core index']
  #allocation1 [shape = 'u32[72,128]{1,0:T(1,128)}', space=vmem, size = 0x9000, scoped, tag = 'internal scratch']
  #allocation2 [shape = 'f32[1,1]{1,0:T(1,128)S(1)}', space=vmem, size = 0x200, scoped, tag = 'scoped memory for tpu_custom_call.1']
  %s0 = inlined_call_operand.hbm [shape: f32[9,1,256], index: 0, kind: input, shape index: {}]
  %s1 = inlined_call_operand.hbm [shape: f32[2,8,256], index: 1, kind: input, shape index: {}]
  %s2 = inlined_call_operand.vmem [shape: f32[8,72], index: 2, kind: input, shape index: {}]
  %s3 = inlined_call_operand.vmem [shape: f32[8,1], index: 3, kind: input, shape index: {}]
  %s4 = inlined_call_operand.vmem [shape: f32[8,72], index: 4, kind: input, shape index: {}]
  %s5 = inlined_call_operand.vmem [shape: f32[8,1], index: 5, kind: input, shape index: {}]
  %s6 = inlined_call_operand.vmem [shape: f32[8,72], index: 6, kind: input, shape index: {}]
  %s7 = inlined_call_operand.vmem [shape: f32[8,1], index: 7, kind: input, shape index: {}]
  %s8 = inlined_call_operand.vmem [shape: f32[8,1], index: 8, kind: input, shape index: {}]
  %s9 = inlined_call_operand.<no memory space> [shape: f32[1,1], index: 9, kind: input, shape index: {}]
  %s10 = inlined_call_operand.vmem [shape: f32[8,1], index: 10, kind: input, shape index: {}]
  %s11 = inlined_call_operand.vmem [shape: f32[8,1], index: 11, kind: input, shape index: {}]
  %s12 = inlined_call_operand.vmem [shape: f32[8,72], index: 12, kind: input, shape index: {}]
  %s13 = inlined_call_operand.vmem [shape: f32[8,1], index: 13, kind: input, shape index: {}]
  %s14 = inlined_call_operand.hbm [shape: f32[2,8,256], index: 14, kind: output, shape index: {}]
  %s15 = sld [smem:[#allocation0]]
  $region97: #{tpu_custom_call.1} parent=0
    _
  %s17 = ssub.s32 1, %s15
  %s18 = scalar_select 0, %s17, %s15
  %v19 = vstv %s9
  %20 = vst [vmem:[#allocation2] sm:$0x1] %v19
  $region1: #{tpu_custom_call.1} parent=0
    #allocation3 [shape = 'u8[9216]{0}', space=vmem, size = 0x2400, scoped, tag = 'input window, operand 0, single buffered']
    #allocation4 [shape = 's32[2]{0}', space=sflag, size = 0x8, scoped, tag = 'scoped memory for tpu_custom_call.1']
    #allocation5 [shape = 's32[2]{0}', space=sflag, size = 0x8, scoped, tag = 'scoped memory for tpu_custom_call.1']
    #allocation6 [shape = 'u8[16384]{0}', space=vmem, size = 0x4000, scoped, tag = 'input window, operand 1']
    #allocation7 [shape = 's32[2]{0}', space=sflag, size = 0x8, scoped, tag = 'scoped memory for tpu_custom_call.1']
    #allocation8 [shape = 'u8[16384]{0}', space=vmem, size = 0x4000, scoped, tag = 'output window, operand 0']
    %21 = vsyncpa [#allocation4], 0
    %22 = vsyncpa [#allocation7], 0
    %s23 = scalar_lea.sflag [#allocation7], 1
    %24 = vsyncpa %s23, 0
    %25 = vsyncpa [#allocation5], 0
    %s26 = scalar_lea.sflag [#allocation5], 1
    %27 = vsyncpa %s26, 0
    loop: start=0, step=1, limit=4
    $region2: #{tpu_custom_call.1} parent=1 // loop_pre_header
      _
    $region3: #{tpu_custom_call.1} parent=1 // loop_header
      %s29 = sphi 0, %s33
      %p30 = scmp.ge.s32.totalorder %s29, 4
      %s37 = sphi 0, %s37
      %s39 = sphi 0, %s37
      %s40 = sphi 0, %s39
      %s54 = sphi 0, %s40
      %s60 = sphi 0, %s62
      %s63 = sphi 0, %s60
      %s64 = sphi 0, %s63
      %s80 = sphi 0, %s64
      %s84 = sphi 0, %s84
      %s86 = sphi 0, %s84
      %s87 = sphi 0, %s86
      %s101 = sphi 0, %s87
      %s105 = sphi 0, %s105
      %s107 = sphi 0, %s105
      %s108 = sphi 0, %s107
      %s122 = sphi 0, %s108
      %s126 = sphi 0, %s126
      %s128 = sphi 0, %s126
      %s129 = sphi 0, %s128
      %s143 = sphi 0, %s129
      %s147 = sphi 0, %s147
      %s149 = sphi 0, %s147
      %s150 = sphi 0, %s149
      %s164 = sphi 0, %s150
      %s168 = sphi 0, %s168
      %s170 = sphi 0, %s168
      %s171 = sphi 0, %s170
      %s185 = sphi 0, %s171
      %s189 = sphi 0, %s189
      %s191 = sphi 0, %s189
      %s192 = sphi 0, %s191
      %s206 = sphi 0, %s192
      %s210 = sphi 0, %s210
      %s212 = sphi 0, %s210
      %s213 = sphi 0, %s212
      %s227 = sphi 0, %s213
      %s231 = sphi 0, %s231
      %s233 = sphi 0, %s231
      %s234 = sphi 0, %s233
      %s248 = sphi 0, %s234
      %s252 = sphi 0, %s252
      %s254 = sphi 0, %s252
      %s255 = sphi 0, %s254
      %s269 = sphi 0, %s255
      %s273 = sphi 0, %s273
      %s275 = sphi 0, %s273
      %s276 = sphi 0, %s275
      %s290 = sphi 0, %s276
      %s294 = sphi 0, %s294
      %s296 = sphi 0, %s294
      %s297 = sphi 0, %s296
      %s311 = sphi 0, %s297
      %s315 = sphi 0, %s315
      %s317 = sphi 0, %s315
      %s318 = sphi 0, %s317
      %s332 = sphi 0, %s318
      %s338 = sphi 0, %s340
      %s341 = sphi 0, %s338
      %s342 = sphi 0, %s341
      %s358 = sphi 0, %s342
    $region4: #{tpu_custom_call.1} parent=1 // loop_header_branch
      %32 = sbr.rel (%p30) target = $region8
    $region5: #{tpu_custom_call.1} parent=1 // loop_body
      %s34 = ssub.s32 %s29, 1
      %s35 = ssub.s32 %s29, 2
      %s36 = sadd.s32 %s29, 1
      %s38 = sadd.s32 %s37, 1
      %p41 = scmp.eq.s32.totalorder %s29, 1
      %p42 = scmp.ne.s32.totalorder %s37, %s39
      %p43 = scmp.eq.s32.totalorder %s29, 0
      %p44 = por %p42, %p43
      %p45 = scmp.ne.s32.totalorder %s37, %s39
      %p46 = scmp.eq.s32.totalorder %s34, 1
      %p47 = por %p45, %p46
      %p48 = scmp.ne.s32.totalorder %s39, %s40
      %p49 = scmp.eq.s32.totalorder %s34, 0
      %p50 = por %p48, %p49
      %p51 = scmp.ne.s32.totalorder %s39, %s40
      %p52 = scmp.eq.s32.totalorder %s35, 1
      %p53 = por %p51, %p52
      %p55 = scmp.ne.s32.totalorder %s40, %s54
      %p56 = scmp.eq.s32.totalorder %s35, 0
      %p57 = por %p55, %p56
      %s58 = ssub.s32 %s29, %s36
      %p59 = scmp.eq.s32.totalorder %s58, 0
      %s61 = sadd.s32 %s60, 1
      %s62 = scalar_select %p59, %s60, %s61
      %p65 = pneg %p59
      %p66 = scmp.eq.s32.totalorder %s29, 1
      %p67 = por %p65, %p66
      %p68 = scmp.ne.s32.totalorder %s60, %s63
      %p69 = scmp.eq.s32.totalorder %s29, 0
      %p70 = por %p68, %p69
      %p71 = scmp.ne.s32.totalorder %s60, %s63
      %p72 = scmp.eq.s32.totalorder %s34, 1
      %p73 = por %p71, %p72
      %p74 = scmp.ne.s32.totalorder %s63, %s64
      %p75 = scmp.eq.s32.totalorder %s34, 0
      %p76 = por %p74, %p75
      %p77 = scmp.ne.s32.totalorder %s63, %s64
      %p78 = scmp.eq.s32.totalorder %s35, 1
      %p79 = por %p77, %p78
      %p81 = scmp.ne.s32.totalorder %s64, %s80
      %p82 = scmp.eq.s32.totalorder %s35, 0
      %p83 = por %p81, %p82
      %s85 = sadd.s32 %s84, 1
      %p88 = scmp.eq.s32.totalorder %s29, 1
      %p89 = scmp.ne.s32.totalorder %s84, %s86
      %p90 = scmp.eq.s32.totalorder %s29, 0
      %p91 = por %p89, %p90
      %p92 = scmp.ne.s32.totalorder %s84, %s86
      %p93 = scmp.eq.s32.totalorder %s34, 1
      %p94 = por %p92, %p93
      %p95 = scmp.ne.s32.totalorder %s86, %s87
      %p96 = scmp.eq.s32.totalorder %s34, 0
      %p97 = por %p95, %p96
      %p98 = scmp.ne.s32.totalorder %s86, %s87
      %p99 = scmp.eq.s32.totalorder %s35, 1
      %p100 = por %p98, %p99
      %p102 = scmp.ne.s32.totalorder %s87, %s101
      %p103 = scmp.eq.s32.totalorder %s35, 0
      %p104 = por %p102, %p103
      %s106 = sadd.s32 %s105, 1
      %p109 = scmp.eq.s32.totalorder %s29, 1
      %p110 = scmp.ne.s32.totalorder %s105, %s107
      %p111 = scmp.eq.s32.totalorder %s29, 0
      %p112 = por %p110, %p111
      %p113 = scmp.ne.s32.totalorder %s105, %s107
      %p114 = scmp.eq.s32.totalorder %s34, 1
      %p115 = por %p113, %p114
      %p116 = scmp.ne.s32.totalorder %s107, %s108
      %p117 = scmp.eq.s32.totalorder %s34, 0
      %p118 = por %p116, %p117
      %p119 = scmp.ne.s32.totalorder %s107, %s108
      %p120 = scmp.eq.s32.totalorder %s35, 1
      %p121 = por %p119, %p120
      %p123 = scmp.ne.s32.totalorder %s108, %s122
      %p124 = scmp.eq.s32.totalorder %s35, 0
      %p125 = por %p123, %p124
      %s127 = sadd.s32 %s126, 1
      %p130 = scmp.eq.s32.totalorder %s29, 1
      %p131 = scmp.ne.s32.totalorder %s126, %s128
      %p132 = scmp.eq.s32.totalorder %s29, 0
      %p133 = por %p131, %p132
      %p134 = scmp.ne.s32.totalorder %s126, %s128
      %p135 = scmp.eq.s32.totalorder %s34, 1
      %p136 = por %p134, %p135
      %p137 = scmp.ne.s32.totalorder %s128, %s129
      %p138 = scmp.eq.s32.totalorder %s34, 0
      %p139 = por %p137, %p138
      %p140 = scmp.ne.s32.totalorder %s128, %s129
      %p141 = scmp.eq.s32.totalorder %s35, 1
      %p142 = por %p140, %p141
      %p144 = scmp.ne.s32.totalorder %s129, %s143
      %p145 = scmp.eq.s32.totalorder %s35, 0
      %p146 = por %p144, %p145
      %s148 = sadd.s32 %s147, 1
      %p151 = scmp.eq.s32.totalorder %s29, 1
      %p152 = scmp.ne.s32.totalorder %s147, %s149
      %p153 = scmp.eq.s32.totalorder %s29, 0
      %p154 = por %p152, %p153
      %p155 = scmp.ne.s32.totalorder %s147, %s149
      %p156 = scmp.eq.s32.totalorder %s34, 1
      %p157 = por %p155, %p156
      %p158 = scmp.ne.s32.totalorder %s149, %s150
      %p159 = scmp.eq.s32.totalorder %s34, 0
      %p160 = por %p158, %p159
      %p161 = scmp.ne.s32.totalorder %s149, %s150
      %p162 = scmp.eq.s32.totalorder %s35, 1
      %p163 = por %p161, %p162
      %p165 = scmp.ne.s32.totalorder %s150, %s164
      %p166 = scmp.eq.s32.totalorder %s35, 0
      %p167 = por %p165, %p166
      %s169 = sadd.s32 %s168, 1
      %p172 = scmp.eq.s32.totalorder %s29, 1
      %p173 = scmp.ne.s32.totalorder %s168, %s170
      %p174 = scmp.eq.s32.totalorder %s29, 0
      %p175 = por %p173, %p174
      %p176 = scmp.ne.s32.totalorder %s168, %s170
      %p177 = scmp.eq.s32.totalorder %s34, 1
      %p178 = por %p176, %p177
      %p179 = scmp.ne.s32.totalorder %s170, %s171
      %p180 = scmp.eq.s32.totalorder %s34, 0
      %p181 = por %p179, %p180
      %p182 = scmp.ne.s32.totalorder %s170, %s171
      %p183 = scmp.eq.s32.totalorder %s35, 1
      %p184 = por %p182, %p183
      %p186 = scmp.ne.s32.totalorder %s171, %s185
      %p187 = scmp.eq.s32.totalorder %s35, 0
      %p188 = por %p186, %p187
      %s190 = sadd.s32 %s189, 1
      %p193 = scmp.eq.s32.totalorder %s29, 1
      %p194 = scmp.ne.s32.totalorder %s189, %s191
      %p195 = scmp.eq.s32.totalorder %s29, 0
      %p196 = por %p194, %p195
      %p197 = scmp.ne.s32.totalorder %s189, %s191
      %p198 = scmp.eq.s32.totalorder %s34, 1
      %p199 = por %p197, %p198
      %p200 = scmp.ne.s32.totalorder %s191, %s192
      %p201 = scmp.eq.s32.totalorder %s34, 0
      %p202 = por %p200, %p201
      %p203 = scmp.ne.s32.totalorder %s191, %s192
      %p204 = scmp.eq.s32.totalorder %s35, 1
      %p205 = por %p203, %p204
      %p207 = scmp.ne.s32.totalorder %s192, %s206
      %p208 = scmp.eq.s32.totalorder %s35, 0
      %p209 = por %p207, %p208
      %s211 = sadd.s32 %s210, 1
      %p214 = scmp.eq.s32.totalorder %s29, 1
      %p215 = scmp.ne.s32.totalorder %s210, %s212
      %p216 = scmp.eq.s32.totalorder %s29, 0
      %p217 = por %p215, %p216
      %p218 = scmp.ne.s32.totalorder %s210, %s212
      %p219 = scmp.eq.s32.totalorder %s34, 1
      %p220 = por %p218, %p219
      %p221 = scmp.ne.s32.totalorder %s212, %s213
      %p222 = scmp.eq.s32.totalorder %s34, 0
      %p223 = por %p221, %p222
      %p224 = scmp.ne.s32.totalorder %s212, %s213
      %p225 = scmp.eq.s32.totalorder %s35, 1
      %p226 = por %p224, %p225
      %p228 = scmp.ne.s32.totalorder %s213, %s227
      %p229 = scmp.eq.s32.totalorder %s35, 0
      %p230 = por %p228, %p229
      %s232 = sadd.s32 %s231, 1
      %p235 = scmp.eq.s32.totalorder %s29, 1
      %p236 = scmp.ne.s32.totalorder %s231, %s233
      %p237 = scmp.eq.s32.totalorder %s29, 0
      %p238 = por %p236, %p237
      %p239 = scmp.ne.s32.totalorder %s231, %s233
      %p240 = scmp.eq.s32.totalorder %s34, 1
      %p241 = por %p239, %p240
      %p242 = scmp.ne.s32.totalorder %s233, %s234
      %p243 = scmp.eq.s32.totalorder %s34, 0
      %p244 = por %p242, %p243
      %p245 = scmp.ne.s32.totalorder %s233, %s234
      %p246 = scmp.eq.s32.totalorder %s35, 1
      %p247 = por %p245, %p246
      %p249 = scmp.ne.s32.totalorder %s234, %s248
      %p250 = scmp.eq.s32.totalorder %s35, 0
      %p251 = por %p249, %p250
      %s253 = sadd.s32 %s252, 1
      %p256 = scmp.eq.s32.totalorder %s29, 1
      %p257 = scmp.ne.s32.totalorder %s252, %s254
      %p258 = scmp.eq.s32.totalorder %s29, 0
      %p259 = por %p257, %p258
      %p260 = scmp.ne.s32.totalorder %s252, %s254
      %p261 = scmp.eq.s32.totalorder %s34, 1
      %p262 = por %p260, %p261
      %p263 = scmp.ne.s32.totalorder %s254, %s255
      %p264 = scmp.eq.s32.totalorder %s34, 0
      %p265 = por %p263, %p264
      %p266 = scmp.ne.s32.totalorder %s254, %s255
      %p267 = scmp.eq.s32.totalorder %s35, 1
      %p268 = por %p266, %p267
      %p270 = scmp.ne.s32.totalorder %s255, %s269
      %p271 = scmp.eq.s32.totalorder %s35, 0
      %p272 = por %p270, %p271
      %s274 = sadd.s32 %s273, 1
      %p277 = scmp.eq.s32.totalorder %s29, 1
      %p278 = scmp.ne.s32.totalorder %s273, %s275
      %p279 = scmp.eq.s32.totalorder %s29, 0
      %p280 = por %p278, %p279
      %p281 = scmp.ne.s32.totalorder %s273, %s275
      %p282 = scmp.eq.s32.totalorder %s34, 1
      %p283 = por %p281, %p282
      %p284 = scmp.ne.s32.totalorder %s275, %s276
      %p285 = scmp.eq.s32.totalorder %s34, 0
      %p286 = por %p284, %p285
      %p287 = scmp.ne.s32.totalorder %s275, %s276
      %p288 = scmp.eq.s32.totalorder %s35, 1
      %p289 = por %p287, %p288
      %p291 = scmp.ne.s32.totalorder %s276, %s290
      %p292 = scmp.eq.s32.totalorder %s35, 0
      %p293 = por %p291, %p292
      %s295 = sadd.s32 %s294, 1
      %p298 = scmp.eq.s32.totalorder %s29, 1
      %p299 = scmp.ne.s32.totalorder %s294, %s296
      %p300 = scmp.eq.s32.totalorder %s29, 0
      %p301 = por %p299, %p300
      %p302 = scmp.ne.s32.totalorder %s294, %s296
      %p303 = scmp.eq.s32.totalorder %s34, 1
      %p304 = por %p302, %p303
      %p305 = scmp.ne.s32.totalorder %s296, %s297
      %p306 = scmp.eq.s32.totalorder %s34, 0
      %p307 = por %p305, %p306
      %p308 = scmp.ne.s32.totalorder %s296, %s297
      %p309 = scmp.eq.s32.totalorder %s35, 1
      %p310 = por %p308, %p309
      %p312 = scmp.ne.s32.totalorder %s297, %s311
      %p313 = scmp.eq.s32.totalorder %s35, 0
      %p314 = por %p312, %p313
      %s316 = sadd.s32 %s315, 1
      %p319 = scmp.eq.s32.totalorder %s29, 1
      %p320 = scmp.ne.s32.totalorder %s315, %s317
      %p321 = scmp.eq.s32.totalorder %s29, 0
      %p322 = por %p320, %p321
      %p323 = scmp.ne.s32.totalorder %s315, %s317
      %p324 = scmp.eq.s32.totalorder %s34, 1
      %p325 = por %p323, %p324
      %p326 = scmp.ne.s32.totalorder %s317, %s318
      %p327 = scmp.eq.s32.totalorder %s34, 0
      %p328 = por %p326, %p327
      %p329 = scmp.ne.s32.totalorder %s317, %s318
      %p330 = scmp.eq.s32.totalorder %s35, 1
      %p331 = por %p329, %p330
      %p333 = scmp.ne.s32.totalorder %s318, %s332
      %p334 = scmp.eq.s32.totalorder %s35, 0
      %p335 = por %p333, %p334
      %s336 = ssub.s32 %s29, %s36
      %p337 = scmp.eq.s32.totalorder %s336, 0
      %s339 = sadd.s32 %s338, 1
      %s340 = scalar_select %p337, %s338, %s339
      %p343 = pneg %p337
      %p344 = scmp.eq.s32.totalorder %s29, 1
      %p345 = por %p343, %p344
      %p346 = scmp.ne.s32.totalorder %s338, %s341
      %p347 = scmp.eq.s32.totalorder %s29, 0
      %p348 = por %p346, %p347
      %p349 = scmp.ne.s32.totalorder %s338, %s341
      %p350 = scmp.eq.s32.totalorder %s34, 1
      %p351 = por %p349, %p350
      %p352 = scmp.ne.s32.totalorder %s341, %s342
      %p353 = scmp.eq.s32.totalorder %s34, 0
      %p354 = por %p352, %p353
      %p355 = scmp.ne.s32.totalorder %s341, %s342
      %p356 = scmp.eq.s32.totalorder %s35, 1
      %p357 = por %p355, %p356
      %p359 = scmp.ne.s32.totalorder %s342, %s358
      %p360 = scmp.eq.s32.totalorder %s35, 0
      %p361 = por %p359, %p360
      %p362 = scmp.le.s32.totalorder 1, %s29
      %p363 = scmp.lt.s32.totalorder %s29, 3
      %p364 = pnand %p362, %p363
      %p365 = pneg %p364
      // Predicated region
      $region9: #{tpu_custom_call.1} parent=5 // pred_check
        _
      $region10: #{tpu_custom_call.1} parent=5 // pred_check_branch
        %367 = sbr.rel (%p364) target = $region12
      $region11: #{tpu_custom_call.1} parent=5 // pred_region
        %s368 = ssub.s32 %s29, 1
        // Predicated region
        $region13: #{tpu_custom_call.1} parent=11 // pred_check
          %p369 = pneg %p50
        $region14: #{tpu_custom_call.1} parent=11 // pred_check_branch
          %371 = sbr.rel (%p369) target = $region16
        $region15: #{tpu_custom_call.1} parent=11 // pred_region
          %373 = vsyncadd [#allocation4], 0
          %s374 = sshll.u32 %s0, 4
          %s375 = int_to_ptr.hbm [resolvable:$true] %s374
          %s376 = sshll.u32 [#allocation3], 4
          %s377 = int_to_ptr.vmem [resolvable:$true] %s376
          %382 = dma.hbm_to_vmem [thread:$0]  %s375, 288, %s377, [#allocation4], 32, 32, 2
        $region16: #{tpu_custom_call.1} parent=11 // pred_fallthru
          _
        // Predicated region
        $region17: #{tpu_custom_call.1} parent=11 // pred_check
          %p383 = pneg %p97
        $region18: #{tpu_custom_call.1} parent=11 // pred_check_branch
          %385 = sbr.rel (%p383) target = $region20
        $region19: #{tpu_custom_call.1} parent=11 // pred_region
          _
        $region20: #{tpu_custom_call.1} parent=11 // pred_fallthru
          _
        // Predicated region
        $region21: #{tpu_custom_call.1} parent=11 // pred_check
          %p386 = pneg %p118
        $region22: #{tpu_custom_call.1} parent=11 // pred_check_branch
          %388 = sbr.rel (%p386) target = $region24
        $region23: #{tpu_custom_call.1} parent=11 // pred_region
          _
        $region24: #{tpu_custom_call.1} parent=11 // pred_fallthru
          _
        // Predicated region
        $region25: #{tpu_custom_call.1} parent=11 // pred_check
          %p389 = pneg %p139
        $region26: #{tpu_custom_call.1} parent=11 // pred_check_branch
          %391 = sbr.rel (%p389) target = $region28
        $region27: #{tpu_custom_call.1} parent=11 // pred_region
          _
        $region28: #{tpu_custom_call.1} parent=11 // pred_fallthru
          _
        // Predicated region
        $region29: #{tpu_custom_call.1} parent=11 // pred_check
          %p392 = pneg %p160
        $region30: #{tpu_custom_call.1} parent=11 // pred_check_branch
          %394 = sbr.rel (%p392) target = $region32
        $region31: #{tpu_custom_call.1} parent=11 // pred_region
          _
        $region32: #{tpu_custom_call.1} parent=11 // pred_fallthru
          _
        // Predicated region
        $region33: #{tpu_custom_call.1} parent=11 // pred_check
          %p395 = pneg %p181
        $region34: #{tpu_custom_call.1} parent=11 // pred_check_branch
          %397 = sbr.rel (%p395) target = $region36
        $region35: #{tpu_custom_call.1} parent=11 // pred_region
          _
        $region36: #{tpu_custom_call.1} parent=11 // pred_fallthru
          _
        // Predicated region
        $region37: #{tpu_custom_call.1} parent=11 // pred_check
          %p398 = pneg %p202
        $region38: #{tpu_custom_call.1} parent=11 // pred_check_branch
          %400 = sbr.rel (%p398) target = $region40
        $region39: #{tpu_custom_call.1} parent=11 // pred_region
          _
        $region40: #{tpu_custom_call.1} parent=11 // pred_fallthru
          _
        // Predicated region
        $region41: #{tpu_custom_call.1} parent=11 // pred_check
          %p401 = pneg %p223
        $region42: #{tpu_custom_call.1} parent=11 // pred_check_branch
          %403 = sbr.rel (%p401) target = $region44
        $region43: #{tpu_custom_call.1} parent=11 // pred_region
          _
        $region44: #{tpu_custom_call.1} parent=11 // pred_fallthru
          _
        // Predicated region
        $region45: #{tpu_custom_call.1} parent=11 // pred_check
          %p404 = pneg %p244
        $region46: #{tpu_custom_call.1} parent=11 // pred_check_branch
          %406 = sbr.rel (%p404) target = $region48
        $region47: #{tpu_custom_call.1} parent=11 // pred_region
          _
        $region48: #{tpu_custom_call.1} parent=11 // pred_fallthru
          _
        // Predicated region
        $region49: #{tpu_custom_call.1} parent=11 // pred_check
          %p407 = pneg %p265
        $region50: #{tpu_custom_call.1} parent=11 // pred_check_branch
          %409 = sbr.rel (%p407) target = $region52
        $region51: #{tpu_custom_call.1} parent=11 // pred_region
          _
        $region52: #{tpu_custom_call.1} parent=11 // pred_fallthru
          _
        // Predicated region
        $region53: #{tpu_custom_call.1} parent=11 // pred_check
          %p410 = pneg %p286
        $region54: #{tpu_custom_call.1} parent=11 // pred_check_branch
          %412 = sbr.rel (%p410) target = $region56
        $region55: #{tpu_custom_call.1} parent=11 // pred_region
          _
        $region56: #{tpu_custom_call.1} parent=11 // pred_fallthru
          _
        // Predicated region
        $region57: #{tpu_custom_call.1} parent=11 // pred_check
          %p413 = pneg %p307
        $region58: #{tpu_custom_call.1} parent=11 // pred_check_branch
          %415 = sbr.rel (%p413) target = $region60
        $region59: #{tpu_custom_call.1} parent=11 // pred_region
          _
        $region60: #{tpu_custom_call.1} parent=11 // pred_fallthru
          _
        // Predicated region
        $region61: #{tpu_custom_call.1} parent=11 // pred_check
          %p416 = pneg %p328
        $region62: #{tpu_custom_call.1} parent=11 // pred_check_branch
          %418 = sbr.rel (%p416) target = $region64
        $region63: #{tpu_custom_call.1} parent=11 // pred_region
          _
        $region64: #{tpu_custom_call.1} parent=11 // pred_fallthru
          _
      $region12: #{tpu_custom_call.1} parent=5 // pred_fallthru
        _
      %p419 = scmp.lt.s32.totalorder %s29, 2
      // Predicated region
      $region65: #{tpu_custom_call.1} parent=5 // pred_check
        %p420 = pneg %p419
      $region66: #{tpu_custom_call.1} parent=5 // pred_check_branch
        %422 = sbr.rel (%p420) target = $region68
      $region67: #{tpu_custom_call.1} parent=5 // pred_region
        // Predicated region
        $region69: #{tpu_custom_call.1} parent=67 // pred_check
          %p423 = pneg %p70
        $region70: #{tpu_custom_call.1} parent=67 // pred_check_branch
          %425 = sbr.rel (%p423) target = $region72
        $region71: #{tpu_custom_call.1} parent=67 // pred_region
          %s426 = sand.u32 %s60, 1
          %s427 = scalar_lea.sflag [#allocation7], %s426
          %s428 = sand.u32 %s60, 1
          %s429 = smul.addr %s428, 16
          %s430 = scalar_lea.vmem [#allocation6], %s429
          %432 = vsyncadd %s427, 0
          %s433 = smul.addr %s29, 2
          %s434 = smul.addr %s433, 8
          %s435 = scalar_lea.hbm %s1, %s434
          %s437 = sshll.u32 %s435, 4
          %s438 = int_to_ptr.hbm [resolvable:$true] %s437
          %s439 = sshll.u32 %s430, 4
          %s440 = int_to_ptr.vmem [resolvable:$true] %s439
          %442 = dma.hbm_to_vmem [thread:$0]  %s438, 256, %s440, %s427
        $region72: #{tpu_custom_call.1} parent=67 // pred_fallthru
          _
      $region68: #{tpu_custom_call.1} parent=5 // pred_fallthru
        _
      %p443 = scmp.le.s32.totalorder 1, %s29
      %p444 = scmp.lt.s32.totalorder %s29, 3
      %p445 = pnand %p443, %p444
      %p446 = pneg %p445
      // Predicated region
      $region73: #{tpu_custom_call.1} parent=5 // pred_check
        _
      $region74: #{tpu_custom_call.1} parent=5 // pred_check_branch
        %448 = sbr.rel (%p445) target = $region76
      $region75: #{tpu_custom_call.1} parent=5 // pred_region
        %s449 = ssub.s32 %s29, 1
        // Predicated region
        $region77: #{tpu_custom_call.1} parent=75 // pred_check
          %p450 = pneg %p50
        $region78: #{tpu_custom_call.1} parent=75 // pred_check_branch
          %452 = sbr.rel (%p450) target = $region80
        $region79: #{tpu_custom_call.1} parent=75 // pred_region
          %454 = dma.done [#allocation4], 288
        $region80: #{tpu_custom_call.1} parent=75 // pred_fallthru
          _
        %s455 = sand.u32 %s63, 1
        %s456 = scalar_lea.sflag [#allocation7], %s455
        %s457 = sand.u32 %s63, 1
        %s458 = smul.addr %s457, 16
        %s459 = scalar_lea.vmem [#allocation6], %s458
        // Predicated region
        $region81: #{tpu_custom_call.1} parent=75 // pred_check
          %p460 = pneg %p76
        $region82: #{tpu_custom_call.1} parent=75 // pred_check_branch
          %462 = sbr.rel (%p460) target = $region84
        $region83: #{tpu_custom_call.1} parent=75 // pred_region
          %464 = dma.done %s456, 256
        $region84: #{tpu_custom_call.1} parent=75 // pred_fallthru
          _
        %p465 = pneg %p50
        %p466 = pneg %p47
        %s467 = sand.u32 %s63, 1
        %s468 = scalar_lea.sflag [#allocation7], %s467
        %s469 = sand.u32 %s63, 1
        %s470 = smul.addr %s469, 16
        %s471 = scalar_lea.vmem [#allocation6], %s470
        %p472 = pneg %p76
        %p473 = pneg %p73
        %p474 = pneg %p97
        %p475 = pneg %p94
        %p476 = pneg %p118
        %p477 = pneg %p115
        %p478 = pneg %p139
        %p479 = pneg %p136
        %p480 = pneg %p160
        %p481 = pneg %p157
        %p482 = pneg %p181
        %p483 = pneg %p178
        %p484 = pneg %p202
        %p485 = pneg %p199
        %p486 = pneg %p223
        %p487 = pneg %p220
        %p488 = pneg %p244
        %p489 = pneg %p241
        %p490 = pneg %p265
        %p491 = pneg %p262
        %p492 = pneg %p286
        %p493 = pneg %p283
        %p494 = pneg %p307
        %p495 = pneg %p304
        %p496 = pneg %p328
        %p497 = pneg %p325
        %p498 = pneg %p354
        %p499 = pneg %p351
        %s500 = sand.u32 %s341, 1
        %s501 = scalar_lea.sflag [#allocation5], %s500
        %s502 = sand.u32 %s341, 1
        %s503 = smul.addr %s502, 16
        %s504 = scalar_lea.vmem [#allocation8], %s503
        %v505 = vld [vmem:[%s459] sm:$0xff]
        %v506 = vld [vmem:[%s459 + $0x8] sm:$0xff]
        %507 = vrot.lane.b32.xlu0 %v505, 17
        %v508 = vpop.permute.xlu0 %507
        %509 = vrot.lane.b32.xlu0 %v506, 17
        %v510 = vpop.permute.xlu0 %509
        %v511 = vlaneseq
        %v512 = vand.u32 %v511, 127
        %vm513 = vcmp.lt.s32.totalorder %v512, 17
        %v514 = vsel %vm513, %v508, %v510
        %v515 = vsel %vm513, %v510, %v508
        %v516 = vld [vmem:[#allocation3] sm:$0x3]
        %v518 = vperm.slane %v516, 0
        %v519 = vperm.slane %v516, 1
        %v522 = vmul.f32 %v515, %v518
        %v523 = vmul.f32 %v514, %v519
        %524 = vrot.lane.b32.xlu0 %v505, 16
        %v525 = vpop.permute.xlu0 %524
        %526 = vrot.lane.b32.xlu0 %v506, 16
        %v527 = vpop.permute.xlu0 %526
        %vm528 = vcmp.lt.s32.totalorder %v512, 16
        %v529 = vsel %vm528, %v525, %v527
        %v530 = vsel %vm528, %v527, %v525
        %s531 = scalar_lea.vmem [#allocation3], 2
        %v532 = vld [vmem:[%s531] sm:$0x3]
        %v534 = vperm.slane %v532, 0
        %v535 = vperm.slane %v532, 1
        %v538 = vmul.f32 %v530, %v534
        %v539 = vmul.f32 %v529, %v535
        %540 = vrot.lane.b32.xlu0 %v505, 15
        %v541 = vpop.permute.xlu0 %540
        %542 = vrot.lane.b32.xlu0 %v506, 15
        %v543 = vpop.permute.xlu0 %542
        %vm544 = vcmp.lt.s32.totalorder %v512, 15
        %v545 = vsel %vm544, %v541, %v543
        %v546 = vsel %vm544, %v543, %v541
        %s547 = scalar_lea.vmem [#allocation3], 4
        %v548 = vld [vmem:[%s547] sm:$0x3]
        %v550 = vperm.slane %v548, 0
        %v551 = vperm.slane %v548, 1
        %v554 = vmul.f32 %v546, %v550
        %v555 = vmul.f32 %v545, %v551
        %556 = vrot.lane.b32.xlu0 %v505, 1
        %v557 = vpop.permute.xlu0 %556
        %558 = vrot.lane.b32.xlu0 %v506, 1
        %v559 = vpop.permute.xlu0 %558
        %vm560 = vcmp.lt.s32.totalorder %v512, 1
        %v561 = vsel %vm560, %v557, %v559
        %v562 = vsel %vm560, %v559, %v557
        %s563 = scalar_lea.vmem [#allocation3], 6
        %v564 = vld [vmem:[%s563] sm:$0x3]
        %v566 = vperm.slane %v564, 0
        %v567 = vperm.slane %v564, 1
        %v570 = vmul.f32 %v562, %v566
        %v571 = vmul.f32 %v561, %v567
        %572 = vrot.lane.b32.xlu0 %v505, 127
        %v573 = vpop.permute.xlu0 %572
        %574 = vrot.lane.b32.xlu0 %v506, 127
        %v575 = vpop.permute.xlu0 %574
        %vm576 = vcmp.lt.s32.totalorder %v512, 127
        %v577 = vsel %vm576, %v573, %v575
        %v578 = vsel %vm576, %v575, %v573
        %s579 = scalar_lea.vmem [#allocation3], 10
        %v580 = vld [vmem:[%s579] sm:$0x3]
        %v582 = vperm.slane %v580, 0
        %v583 = vperm.slane %v580, 1
        %v586 = vmul.f32 %v577, %v582
        %v587 = vmul.f32 %v578, %v583
        %588 = vrot.lane.b32.xlu0 %v505, 113
        %v589 = vpop.permute.xlu0 %588
        %590 = vrot.lane.b32.xlu0 %v506, 113
        %v591 = vpop.permute.xlu0 %590
        %vm592 = vcmp.lt.s32.totalorder %v512, 113
        %v593 = vsel %vm592, %v589, %v591
        %v594 = vsel %vm592, %v591, %v589
        %s595 = scalar_lea.vmem [#allocation3], 12
        %v596 = vld [vmem:[%s595] sm:$0x3]
        %v598 = vperm.slane %v596, 0
        %v599 = vperm.slane %v596, 1
        %v602 = vmul.f32 %v593, %v598
        %v603 = vmul.f32 %v594, %v599
        %604 = vrot.lane.b32.xlu0 %v505, 112
        %v605 = vpop.permute.xlu0 %604
        %606 = vrot.lane.b32.xlu0 %v506, 112
        %v607 = vpop.permute.xlu0 %606
        %vm608 = vcmp.lt.s32.totalorder %v512, 112
        %v609 = vsel %vm608, %v605, %v607
        %v610 = vsel %vm608, %v607, %v605
        %s611 = scalar_lea.vmem [#allocation3], 14
        %v612 = vld [vmem:[%s611] sm:$0x3]
        %v614 = vperm.slane %v612, 0
        %v615 = vperm.slane %v612, 1
        %v618 = vmul.f32 %v609, %v614
        %v619 = vmul.f32 %v610, %v615
        %620 = vrot.lane.b32.xlu0 %v505, 111
        %v621 = vpop.permute.xlu0 %620
        %622 = vrot.lane.b32.xlu0 %v506, 111
        %v623 = vpop.permute.xlu0 %622
        %vm624 = vcmp.lt.s32.totalorder %v512, 111
        %v625 = vsel %vm624, %v621, %v623
        %v626 = vsel %vm624, %v623, %v621
        %s627 = scalar_lea.vmem [#allocation3], 16
        %v628 = vld [vmem:[%s627] sm:$0x3]
        %v630 = vperm.slane %v628, 0
        %v631 = vperm.slane %v628, 1
        %v634 = vmul.f32 %v625, %v630
        %v635 = vmul.f32 %v626, %v631
        %v636 = vld [vmem:[%s2] sm:$0xff]
        %v637 = vld [vmem:[%s3] sm:$0xff]
        %639 = vset.pattern.permute.xlu0 0
        %640 = vperm.xlu0 %639, %v637
        %v641 = vpop.permute.xlu0 %640
        %vm643 = vcmask 588800
        %v645 = vsel %vm643, %v636, 0
        %647 = vmatpush.msra.mxu0 0.0
        %648 = vmatpush.msra.mxu0 0.0
        %649 = vmatpush.msra.mxu0 0.0
        %650 = vmatpush.msra.mxu0 0.0
        %651 = vmatpush.msra.mxu0 0.0
        %652 = vmatpush.msra.mxu0 0.0
        %653 = vmatpush.msra.mxu0 0.0
        %654 = vmatpush.msra.mxu0 %v634
        %655 = vmatpush.msra.mxu0 %v618
        %656 = vmatpush.msra.mxu0 %v602
        %657 = vmatpush.msra.mxu0 %v586
        %658 = vmatpush.msra.mxu0 %v505
        %659 = vmatpush.msra.mxu0 %v570
        %660 = vmatpush.msra.mxu0 %v554
        %661 = vmatpush.msra.mxu0 %v538
        %662 = vmatpush.msra.mxu0 %v522
        %663 = vmatmul.f32.gmra.mxu0 %v645
        %v664 = vpop.f32.mrf.mxu0
        %v665 = vadd.f32 %v641, %v664
        %666 = vdwg.mxu0
        %667 = vmatpush.msra.mxu0 0.0
        %668 = vmatpush.msra.mxu0 0.0
        %669 = vmatpush.msra.mxu0 0.0
        %670 = vmatpush.msra.mxu0 0.0
        %671 = vmatpush.msra.mxu0 0.0
        %672 = vmatpush.msra.mxu0 0.0
        %673 = vmatpush.msra.mxu0 0.0
        %674 = vmatpush.msra.mxu0 %v635
        %675 = vmatpush.msra.mxu0 %v619
        %676 = vmatpush.msra.mxu0 %v603
        %677 = vmatpush.msra.mxu0 %v587
        %678 = vmatpush.msra.mxu0 %v506
        %679 = vmatpush.msra.mxu0 %v571
        %680 = vmatpush.msra.mxu0 %v555
        %681 = vmatpush.msra.mxu0 %v539
        %682 = vmatpush.msra.mxu0 %v523
        %683 = vmatmul.f32.gmra.mxu0 %v645
        %v684 = vpop.f32.mrf.mxu0
        %v685 = vadd.f32 %v641, %v684
        %686 = vdwg.mxu0
        %687 = vrot.lane.b32.xlu0 %v665, 17
        %v688 = vpop.permute.xlu0 %687
        %689 = vrot.lane.b32.xlu0 %v685, 17
        %v690 = vpop.permute.xlu0 %689
        %v691 = vsel %vm513, %v688, %v690
        %v692 = vsel %vm513, %v690, %v688
        %v693 = vmul.f32 %v692, %v518
        %v694 = vmul.f32 %v691, %v519
        %695 = vrot.lane.b32.xlu0 %v665, 16
        %v696 = vpop.permute.xlu0 %695
        %697 = vrot.lane.b32.xlu0 %v685, 16
        %v698 = vpop.permute.xlu0 %697
        %v699 = vsel %vm528, %v696, %v698
        %v700 = vsel %vm528, %v698, %v696
        %v701 = vmul.f32 %v700, %v534
        %v702 = vmul.f32 %v699, %v535
        %703 = vrot.lane.b32.xlu0 %v665, 15
        %v704 = vpop.permute.xlu0 %703
        %705 = vrot.lane.b32.xlu0 %v685, 15
        %v706 = vpop.permute.xlu0 %705
        %v707 = vsel %vm544, %v704, %v706
        %v708 = vsel %vm544, %v706, %v704
        %v709 = vmul.f32 %v708, %v550
        %v710 = vmul.f32 %v707, %v551
        %711 = vrot.lane.b32.xlu0 %v665, 1
        %v712 = vpop.permute.xlu0 %711
        %713 = vrot.lane.b32.xlu0 %v685, 1
        %v714 = vpop.permute.xlu0 %713
        %v715 = vsel %vm560, %v712, %v714
        %v716 = vsel %vm560, %v714, %v712
        %v717 = vmul.f32 %v716, %v566
        %v718 = vmul.f32 %v715, %v567
        %719 = vrot.lane.b32.xlu0 %v665, 127
        %v720 = vpop.permute.xlu0 %719
        %721 = vrot.lane.b32.xlu0 %v685, 127
        %v722 = vpop.permute.xlu0 %721
        %v723 = vsel %vm576, %v720, %v722
        %v724 = vsel %vm576, %v722, %v720
        %v725 = vmul.f32 %v723, %v582
        %v726 = vmul.f32 %v724, %v583
        %727 = vrot.lane.b32.xlu0 %v665, 113
        %v728 = vpop.permute.xlu0 %727
        %729 = vrot.lane.b32.xlu0 %v685, 113
        %v730 = vpop.permute.xlu0 %729
        %v731 = vsel %vm592, %v728, %v730
        %v732 = vsel %vm592, %v730, %v728
        %v733 = vmul.f32 %v731, %v598
        %v734 = vmul.f32 %v732, %v599
        %735 = vrot.lane.b32.xlu0 %v665, 112
        %v736 = vpop.permute.xlu0 %735
        %737 = vrot.lane.b32.xlu0 %v685, 112
        %v738 = vpop.permute.xlu0 %737
        %v739 = vsel %vm608, %v736, %v738
        %v740 = vsel %vm608, %v738, %v736
        %v741 = vmul.f32 %v739, %v614
        %v742 = vmul.f32 %v740, %v615
        %743 = vrot.lane.b32.xlu0 %v665, 111
        %v744 = vpop.permute.xlu0 %743
        %745 = vrot.lane.b32.xlu0 %v685, 111
        %v746 = vpop.permute.xlu0 %745
        %v747 = vsel %vm624, %v744, %v746
        %v748 = vsel %vm624, %v746, %v744
        %v749 = vmul.f32 %v747, %v630
        %v750 = vmul.f32 %v748, %v631
        %v751 = vld [vmem:[%s4] sm:$0xff]
        %v752 = vld [vmem:[%s5] sm:$0xff]
        %754 = vset.pattern.permute.xlu0 0
        %755 = vperm.xlu0 %754, %v752
        %v756 = vpop.permute.xlu0 %755
        %v759 = vsel %vm643, %v751, 0
        %761 = vmatpush.msra.mxu0 0.0
        %762 = vmatpush.msra.mxu0 0.0
        %763 = vmatpush.msra.mxu0 0.0
        %764 = vmatpush.msra.mxu0 0.0
        %765 = vmatpush.msra.mxu0 0.0
        %766 = vmatpush.msra.mxu0 0.0
        %767 = vmatpush.msra.mxu0 0.0
        %768 = vmatpush.msra.mxu0 %v749
        %769 = vmatpush.msra.mxu0 %v741
        %770 = vmatpush.msra.mxu0 %v733
        %771 = vmatpush.msra.mxu0 %v725
        %772 = vmatpush.msra.mxu0 %v665
        %773 = vmatpush.msra.mxu0 %v717
        %774 = vmatpush.msra.mxu0 %v709
        %775 = vmatpush.msra.mxu0 %v701
        %776 = vmatpush.msra.mxu0 %v693
        %777 = vmatmul.f32.gmra.mxu0 %v759
        %v778 = vpop.f32.mrf.mxu0
        %v779 = vadd.f32 %v756, %v778
        %780 = vdwg.mxu0
        %781 = vmatpush.msra.mxu0 0.0
        %782 = vmatpush.msra.mxu0 0.0
        %783 = vmatpush.msra.mxu0 0.0
        %784 = vmatpush.msra.mxu0 0.0
        %785 = vmatpush.msra.mxu0 0.0
        %786 = vmatpush.msra.mxu0 0.0
        %787 = vmatpush.msra.mxu0 0.0
        %788 = vmatpush.msra.mxu0 %v750
        %789 = vmatpush.msra.mxu0 %v742
        %790 = vmatpush.msra.mxu0 %v734
        %791 = vmatpush.msra.mxu0 %v726
        %792 = vmatpush.msra.mxu0 %v685
        %793 = vmatpush.msra.mxu0 %v718
        %794 = vmatpush.msra.mxu0 %v710
        %795 = vmatpush.msra.mxu0 %v702
        %796 = vmatpush.msra.mxu0 %v694
        %797 = vmatmul.f32.gmra.mxu0 %v759
        %v798 = vpop.f32.mrf.mxu0
        %v799 = vadd.f32 %v756, %v798
        %800 = vdwg.mxu0
        %v801 = vmax.f32 %v779, 0.0
        %v802 = vmax.f32 %v799, 0.0
        %v803 = vld [vmem:[%s12] sm:$0xff]
        %v804 = vld [vmem:[%s13] sm:$0xff]
        %806 = vset.pattern.permute.xlu0 0
        %807 = vperm.xlu0 %806, %v804
        %v808 = vpop.permute.xlu0 %807
        %v811 = vsel %vm643, %v803, 0
        %813 = vmatpush.msra.mxu0 0.0
        %814 = vmatpush.msra.mxu0 0.0
        %815 = vmatpush.msra.mxu0 0.0
        %816 = vmatpush.msra.mxu0 0.0
        %817 = vmatpush.msra.mxu0 0.0
        %818 = vmatpush.msra.mxu0 0.0
        %819 = vmatpush.msra.mxu0 0.0
        %820 = vmatpush.msra.mxu0 %v749
        %821 = vmatpush.msra.mxu0 %v741
        %822 = vmatpush.msra.mxu0 %v733
        %823 = vmatpush.msra.mxu0 %v725
        %824 = vmatpush.msra.mxu0 %v665
        %825 = vmatpush.msra.mxu0 %v717
        %826 = vmatpush.msra.mxu0 %v709
        %827 = vmatpush.msra.mxu0 %v701
        %828 = vmatpush.msra.mxu0 %v693
        %829 = vmatmul.f32.gmra.mxu0 %v811
        %v830 = vpop.f32.mrf.mxu0
        %v831 = vadd.f32 %v808, %v830
        %832 = vdwg.mxu0
        %833 = vmatpush.msra.mxu0 0.0
        %834 = vmatpush.msra.mxu0 0.0
        %835 = vmatpush.msra.mxu0 0.0
        %836 = vmatpush.msra.mxu0 0.0
        %837 = vmatpush.msra.mxu0 0.0
        %838 = vmatpush.msra.mxu0 0.0
        %839 = vmatpush.msra.mxu0 0.0
        %840 = vmatpush.msra.mxu0 %v750
        %841 = vmatpush.msra.mxu0 %v742
        %842 = vmatpush.msra.mxu0 %v734
        %843 = vmatpush.msra.mxu0 %v726
        %844 = vmatpush.msra.mxu0 %v685
        %845 = vmatpush.msra.mxu0 %v718
        %846 = vmatpush.msra.mxu0 %v710
        %847 = vmatpush.msra.mxu0 %v702
        %848 = vmatpush.msra.mxu0 %v694
        %849 = vmatmul.f32.gmra.mxu0 %v811
        %v850 = vpop.f32.mrf.mxu0
        %v851 = vadd.f32 %v808, %v850
        %852 = vdwg.mxu0
        %853 = vrot.lane.b32.xlu0 %v801, 17
        %v854 = vpop.permute.xlu0 %853
        %855 = vrot.lane.b32.xlu0 %v802, 17
        %v856 = vpop.permute.xlu0 %855
        %v857 = vsel %vm513, %v854, %v856
        %v858 = vsel %vm513, %v856, %v854
        %v859 = vmul.f32 %v858, %v518
        %v860 = vmul.f32 %v857, %v519
        %861 = vrot.lane.b32.xlu0 %v801, 16
        %v862 = vpop.permute.xlu0 %861
        %863 = vrot.lane.b32.xlu0 %v802, 16
        %v864 = vpop.permute.xlu0 %863
        %v865 = vsel %vm528, %v862, %v864
        %v866 = vsel %vm528, %v864, %v862
        %v867 = vmul.f32 %v866, %v534
        %v868 = vmul.f32 %v865, %v535
        %869 = vrot.lane.b32.xlu0 %v801, 15
        %v870 = vpop.permute.xlu0 %869
        %871 = vrot.lane.b32.xlu0 %v802, 15
        %v872 = vpop.permute.xlu0 %871
        %v873 = vsel %vm544, %v870, %v872
        %v874 = vsel %vm544, %v872, %v870
        %v875 = vmul.f32 %v874, %v550
        %v876 = vmul.f32 %v873, %v551
        %877 = vrot.lane.b32.xlu0 %v801, 1
        %v878 = vpop.permute.xlu0 %877
        %879 = vrot.lane.b32.xlu0 %v802, 1
        %v880 = vpop.permute.xlu0 %879
        %v881 = vsel %vm560, %v878, %v880
        %v882 = vsel %vm560, %v880, %v878
        %v883 = vmul.f32 %v882, %v566
        %v884 = vmul.f32 %v881, %v567
        %885 = vrot.lane.b32.xlu0 %v801, 127
        %v886 = vpop.permute.xlu0 %885
        %887 = vrot.lane.b32.xlu0 %v802, 127
        %v888 = vpop.permute.xlu0 %887
        %v889 = vsel %vm576, %v886, %v888
        %v890 = vsel %vm576, %v888, %v886
        %v891 = vmul.f32 %v889, %v582
        %v892 = vmul.f32 %v890, %v583
        %893 = vrot.lane.b32.xlu0 %v801, 113
        %v894 = vpop.permute.xlu0 %893
        %895 = vrot.lane.b32.xlu0 %v802, 113
        %v896 = vpop.permute.xlu0 %895
        %v897 = vsel %vm592, %v894, %v896
        %v898 = vsel %vm592, %v896, %v894
        %v899 = vmul.f32 %v897, %v598
        %v900 = vmul.f32 %v898, %v599
        %901 = vrot.lane.b32.xlu0 %v801, 112
        %v902 = vpop.permute.xlu0 %901
        %903 = vrot.lane.b32.xlu0 %v802, 112
        %v904 = vpop.permute.xlu0 %903
        %v905 = vsel %vm608, %v902, %v904
        %v906 = vsel %vm608, %v904, %v902
        %v907 = vmul.f32 %v905, %v614
        %v908 = vmul.f32 %v906, %v615
        %909 = vrot.lane.b32.xlu0 %v801, 111
        %v910 = vpop.permute.xlu0 %909
        %911 = vrot.lane.b32.xlu0 %v802, 111
        %v912 = vpop.permute.xlu0 %911
        %v913 = vsel %vm624, %v910, %v912
        %v914 = vsel %vm624, %v912, %v910
        %v915 = vmul.f32 %v913, %v630
        %v916 = vmul.f32 %v914, %v631
        %v917 = vld [vmem:[%s6] sm:$0xff]
        %v918 = vld [vmem:[%s7] sm:$0xff]
        %920 = vset.pattern.permute.xlu0 0
        %921 = vperm.xlu0 %920, %v918
        %v922 = vpop.permute.xlu0 %921
        %v925 = vsel %vm643, %v917, 0
        %927 = vmatpush.msra.mxu0 0.0
        %928 = vmatpush.msra.mxu0 0.0
        %929 = vmatpush.msra.mxu0 0.0
        %930 = vmatpush.msra.mxu0 0.0
        %931 = vmatpush.msra.mxu0 0.0
        %932 = vmatpush.msra.mxu0 0.0
        %933 = vmatpush.msra.mxu0 0.0
        %934 = vmatpush.msra.mxu0 %v915
        %935 = vmatpush.msra.mxu0 %v907
        %936 = vmatpush.msra.mxu0 %v899
        %937 = vmatpush.msra.mxu0 %v891
        %938 = vmatpush.msra.mxu0 %v801
        %939 = vmatpush.msra.mxu0 %v883
        %940 = vmatpush.msra.mxu0 %v875
        %941 = vmatpush.msra.mxu0 %v867
        %942 = vmatpush.msra.mxu0 %v859
        %943 = vmatmul.f32.gmra.mxu0 %v925
        %v944 = vpop.f32.mrf.mxu0
        %v945 = vadd.f32 %v922, %v944
        %946 = vdwg.mxu0
        %947 = vmatpush.msra.mxu0 0.0
        %948 = vmatpush.msra.mxu0 0.0
        %949 = vmatpush.msra.mxu0 0.0
        %950 = vmatpush.msra.mxu0 0.0
        %951 = vmatpush.msra.mxu0 0.0
        %952 = vmatpush.msra.mxu0 0.0
        %953 = vmatpush.msra.mxu0 0.0
        %954 = vmatpush.msra.mxu0 %v916
        %955 = vmatpush.msra.mxu0 %v908
        %956 = vmatpush.msra.mxu0 %v900
        %957 = vmatpush.msra.mxu0 %v892
        %958 = vmatpush.msra.mxu0 %v802
        %959 = vmatpush.msra.mxu0 %v884
        %960 = vmatpush.msra.mxu0 %v876
        %961 = vmatpush.msra.mxu0 %v868
        %962 = vmatpush.msra.mxu0 %v860
        %963 = vmatmul.f32.gmra.mxu0 %v925
        %v964 = vpop.f32.mrf.mxu0
        %v965 = vadd.f32 %v922, %v964
        %966 = vdwg.mxu0
        %v967 = vadd.f32 %v945, %v965
        %968 = vadd.xlane.f32.xlu0 %v967
        %v969 = vpop.xlane.xlu0 %968
        %v970 = vmul.f32 %v969, 0.00390625
        %v971 = vld [vmem:[%s8] sm:$0xff]
        %v972 = vmul.f32 %v971, %v970
        %vm973 = vcmask 7168
        %v974 = vsel %vm973, %v972, 0.0
        %v975 = vrot.slane %v974, 4
        %v976 = vadd.f32 %v974, %v975
        %v977 = vrot.slane %v976, 2
        %v978 = vadd.f32 %v976, %v977
        %v979 = vrot.slane %v978, 1
        %v980 = vadd.f32 %v978, %v979
        %v981 = vld [vmem:[#allocation2] sm:$0x1]
        %v982 = vadd.f32 %v980, %v981
        %v983 = vmax.f32 %v982, 0.0
        %v984 = vld [vmem:[%s10] sm:$0xff]
        %v985 = vperm.slane %v983, 0
        %v986 = vmul.f32 %v984, %v985
        %v987 = vadd.f32 %v986, 0.0
        %v988 = vld [vmem:[%s11] sm:$0xff]
        %v989 = vadd.f32 %v987, %v988
        %v990 = vxor.u32 %v989, 2147483648
        %v991 = vmul.f32 %v990, 1.442695
        %v992 = vpow.pop %v991
        %v993 = vadd.f32 %v992, 1.0
        %v994 = vrcp.pop %v993
        %v995 = vmul.f32 %v993, %v994
        %v996 = vsub.f32 1.0, %v995
        %v997 = vmul.f32 %v994, %v996
        %v998 = vadd.f32 %v994, %v997
        %vm999 = vweird.f32 %v993
        %vm1000 = vweird.f32 %v994
        %vm1001 = vmor %vm999, %vm1000
        %v1002 = vsel %vm1001, %v994, %v998
        %v1003 = vand.u32 2147483647, %v993
        %vm1004 = vcmp.eq.f32.partialorder %v1003, 8.507059e+37
        %v1005 = vand.u32 %v993, 2147483648
        %v1006 = vor.u32 1.1754944e-38, %v1005
        %v1007 = vsel %vm1004, %v1006, %v1002
        %v1008 = vmul.f32 1.0, %v1007
        %v1009 = vmul.f32 %v1008, %v970
        %1011 = vset.pattern.permute.xlu0 0
        %1012 = vperm.xlu0 %1011, %v1009
        %v1013 = vpop.permute.xlu0 %1012
        %v1015 = vmul.f32 %v1013, %v518
        %v1016 = vmul.f32 %v1013, %v519
        %v1017 = vmul.f32 %v1013, %v534
        %v1018 = vmul.f32 %v1013, %v535
        %v1019 = vmul.f32 %v1013, %v550
        %v1020 = vmul.f32 %v1013, %v551
        %v1021 = vmul.f32 %v1013, %v566
        %v1022 = vmul.f32 %v1013, %v567
        %s1023 = scalar_lea.vmem [#allocation3], 8
        %v1024 = vld [vmem:[%s1023] sm:$0x3]
        %v1026 = vperm.slane %v1024, 0
        %v1027 = vperm.slane %v1024, 1
        %v1030 = vmul.f32 %v1013, %v1026
        %v1031 = vmul.f32 %v1013, %v1027
        %v1032 = vmul.f32 %v1013, %v582
        %v1033 = vmul.f32 %v1013, %v583
        %v1034 = vmul.f32 %v1013, %v598
        %v1035 = vmul.f32 %v1013, %v599
        %v1036 = vmul.f32 %v1013, %v614
        %v1037 = vmul.f32 %v1013, %v615
        %v1038 = vmul.f32 %v1013, %v630
        %v1039 = vmul.f32 %v1013, %v631
        %1040 = vmatpush.msra.mxu0 0.0
        %1041 = vmatpush.msra.mxu0 0.0
        %1042 = vmatpush.msra.mxu0 0.0
        %1043 = vmatpush.msra.mxu0 0.0
        %1044 = vmatpush.msra.mxu0 0.0
        %1045 = vmatpush.msra.mxu0 0.0
        %1046 = vmatpush.msra.mxu0 0.0
        %1047 = vmatpush.msra.mxu0 %v1038
        %1048 = vmatpush.msra.mxu0 %v1036
        %1049 = vmatpush.msra.mxu0 %v1034
        %1050 = vmatpush.msra.mxu0 %v1032
        %1051 = vmatpush.msra.mxu0 %v1030
        %1052 = vmatpush.msra.mxu0 %v1021
        %1053 = vmatpush.msra.mxu0 %v1019
        %1054 = vmatpush.msra.mxu0 %v1017
        %1055 = vmatpush.msra.mxu0 %v1015
        %1056 = vmatmul.f32.gmra.mxu0 %v811
        %v1057 = vpop.f32.mrf.mxu0
        %v1058 = vadd.f32 0.0, %v1057
        %1059 = vdwg.mxu0
        %1060 = vmatpush.msra.mxu0 0.0
        %1061 = vmatpush.msra.mxu0 0.0
        %1062 = vmatpush.msra.mxu0 0.0
        %1063 = vmatpush.msra.mxu0 0.0
        %1064 = vmatpush.msra.mxu0 0.0
        %1065 = vmatpush.msra.mxu0 0.0
        %1066 = vmatpush.msra.mxu0 0.0
        %1067 = vmatpush.msra.mxu0 %v1039
        %1068 = vmatpush.msra.mxu0 %v1037
        %1069 = vmatpush.msra.mxu0 %v1035
        %1070 = vmatpush.msra.mxu0 %v1033
        %1071 = vmatpush.msra.mxu0 %v1031
        %1072 = vmatpush.msra.mxu0 %v1022
        %1073 = vmatpush.msra.mxu0 %v1020
        %1074 = vmatpush.msra.mxu0 %v1018
        %1075 = vmatpush.msra.mxu0 %v1016
        %1076 = vmatmul.f32.gmra.mxu0 %v811
        %v1077 = vpop.f32.mrf.mxu0
        %v1078 = vadd.f32 0.0, %v1077
        %1079 = vdwg.mxu0
        %v1080 = vadd.f32 %v831, %v1058
        %v1081 = vadd.f32 %v851, %v1078
        %1082 = vst [vmem:[%s504] sm:$0xff] %v1080
        %1083 = vst [vmem:[%s504 + $0x8] sm:$0xff] %v1081
        %s1084 = sand.u32 %s341, 1
        %s1085 = scalar_lea.sflag [#allocation5], %s1084
        %s1086 = sand.u32 %s341, 1
        %s1087 = smul.addr %s1086, 16
        %s1088 = scalar_lea.vmem [#allocation8], %s1087
        // Predicated region
        $region85: #{tpu_custom_call.1} parent=75 // pred_check
          %p1089 = pneg %p351
        $region86: #{tpu_custom_call.1} parent=75 // pred_check_branch
          %1091 = sbr.rel (%p1089) target = $region88
        $region87: #{tpu_custom_call.1} parent=75 // pred_region
          %1093 = vsyncadd %s1085, 0
          %s1094 = smul.addr %s34, 2
          %s1095 = smul.addr %s1094, 8
          %s1096 = scalar_lea.hbm %s14, %s1095
          %s1098 = sshll.u32 %s1088, 4
          %s1099 = int_to_ptr.vmem [resolvable:$true] %s1098
          %s1100 = sshll.u32 %s1096, 4
          %s1101 = int_to_ptr.hbm [resolvable:$true] %s1100
          %1103 = dma.vmem_to_hbm [thread:$0]  %s1099, 256, %s1101, %s1085
        $region88: #{tpu_custom_call.1} parent=75 // pred_fallthru
          _
      $region76: #{tpu_custom_call.1} parent=5 // pred_fallthru
        _
      %p1104 = scmp.le.s32.totalorder 2, %s29
      // Predicated region
      $region89: #{tpu_custom_call.1} parent=5 // pred_check
        %p1105 = pneg %p1104
      $region90: #{tpu_custom_call.1} parent=5 // pred_check_branch
        %1107 = sbr.rel (%p1105) target = $region92
      $region91: #{tpu_custom_call.1} parent=5 // pred_region
        %s1108 = ssub.s32 %s29, 2
        // Predicated region
        $region93: #{tpu_custom_call.1} parent=91 // pred_check
          %p1109 = pneg %p357
        $region94: #{tpu_custom_call.1} parent=91 // pred_check_branch
          %1111 = sbr.rel (%p1109) target = $region96
        $region95: #{tpu_custom_call.1} parent=91 // pred_region
          %s1112 = sand.u32 %s342, 1
          %s1113 = scalar_lea.sflag [#allocation5], %s1112
          %s1114 = sand.u32 %s342, 1
          %s1115 = smul.addr %s1114, 16
          %s1116 = scalar_lea.vmem [#allocation8], %s1115
          %1118 = dma.done %s1113, 256
        $region96: #{tpu_custom_call.1} parent=91 // pred_fallthru
          _
      $region92: #{tpu_custom_call.1} parent=5 // pred_fallthru
        _
    $region6: #{tpu_custom_call.1} parent=1 // loop_footer
      %s33 = sadd.s32 1, %s29
    $region7: #{tpu_custom_call.1} parent=1 // loop_footer_branch
      %28 = sbr.rel target = $region3
    $region8: #{tpu_custom_call.1} parent=1 // loop_exit
      _
    %1119 = vsyncpa [#allocation4], 1
    %s1120 = scalar_lea.sflag [#allocation4], 1
    %1121 = vsyncpa %s1120, 1
    %1122 = vsyncpa [#allocation7], 1
    %s1123 = scalar_lea.sflag [#allocation7], 1
    %1124 = vsyncpa %s1123, 1
    %1125 = vsyncpa [#allocation5], 1
    %s1126 = scalar_lea.sflag [#allocation5], 1
    %1127 = vsyncpa %s1126, 1

</llo_original>
